<compile_context>
chip_gen: v7x
topology: tpu7x:2x2x1
jax: 0.10.0
libtpu: 0.0.40
codegen_flags: <defaults>
</compile_context>

<pallas_src>
import jax
import jax.numpy as jnp
from jax.experimental import pallas as pl
from jax.experimental.pallas import tpu as pltpu


def _gm_score_kernel(scale_ref, x_ref, m1_ref, m2_ref, logw_ref, out_ref):
    # scale_ref : (1,)       f32 SMEM,  -sqrt(1 - acp_t)
    # x_ref     : (TILE, Dp) f32,       Dp = G*D lane-packed samples (G per row)
    # m1_ref    : (G, Dp, K) f32,       zero-padded per-group means for the logits matmul
    # m2_ref    : (G, K, Dp) f32,       zero-padded per-group means for the r@m contraction
    # logw_ref  : (1, K)     f32,       log w_k - 0.5 * ||m_diff_k||^2
    scale = scale_ref[0]
    x = x_ref[...]                                           # (TILE, Dp)
    G = m1_ref.shape[0]

    mix = None
    for g in range(G):
        # logits_{b,k} = logw_adj_k + <x_{b,g,:}, m_k>  (the -0.5||x||^2 term is
        # softmax-invariant and dropped; -0.5||m||^2 is folded into logw_adj).
        xm = jax.lax.dot_general(
            x, m1_ref[g], dimension_numbers=(((1,), (0,)), ((), ())),
            preferred_element_type=jnp.float32)              # (TILE, K) on the MXU
        logits = logw_ref[...] + xm

        # numerically-stable softmax over the K components
        lmax = jnp.max(logits, axis=-1, keepdims=True)
        p = jnp.exp(logits - lmax)
        s = jnp.sum(p, axis=-1, keepdims=True)
        inv = pl.reciprocal(s, approx=True)                  # EUP slot (free)
        inv = inv * (2.0 - s * inv)                          # one Newton step -> ~f32 exact
        r = p * inv                                          # responsibilities (TILE, K)

        # r_g @ m_diff placed into this group's D-wide lane slot via the padded M2[g]
        contrib = jax.lax.dot_general(
            r, m2_ref[g], dimension_numbers=(((1,), (0,)), ((), ())),
            preferred_element_type=jnp.float32)              # (TILE, Dp) on the MXU
        mix = contrib if mix is None else mix + contrib

    out_ref[...] = (scale * (mix - x)).astype(out_ref.dtype)


def epsilon_net_gm(x, t, means, weights, alphas_cumprod, *,
                   block_bytes=4 * 1024 * 1024, out_dtype=jnp.float32):
    """x: (B, D), t: int scalar, means: (K, D), weights: (K,), alphas_cumprod: (T,).
    Returns (B, D):  -(1 - acp_t)^0.5 * grad_x log p_t(x)  (identity covariance GM).

    block_bytes: target payload per streamed x/out block (size by bytes, not rows).
    out_dtype:   set to jnp.bfloat16 to halve the store traffic if downstream allows.
    """
    x = x.astype(jnp.float32)
    means = means.astype(jnp.float32)
    weights = weights.astype(jnp.float32)

    B, D = x.shape
    K = means.shape[0]

    acp = alphas_cumprod[t].astype(jnp.float32)
    m_diff = jnp.sqrt(acp) * means                                   # (K, D), tiny
    logw = jnp.log(weights / jnp.sum(weights))                       # (K,)
    logw_adj = (logw - 0.5 * jnp.sum(m_diff * m_diff, axis=-1)).reshape(1, K)
    scale = jnp.reshape(-jnp.sqrt(1.0 - acp), (1,))                  # -sqrt(1-acp)

    # --- lane packing: G = 128 // D samples side by side on the 128 lanes ---------
    if D <= 128 and 128 % D == 0 and B % (128 // D) == 0:
        G = 128 // D
    else:
        G = 1                                   # fall back to the plain layout
    Bp, Dp = B // G, G * D
    xp = x.reshape(Bp, Dp)                      # free: rows are consecutive in memory

    # Zero-padded per-group means matrices (tiny, resident in VMEM):
    #   M1[g, h*D + d, k] = (g == h) * m_diff[k, d]   -> xp @ M1[g] = <x_{b,g,:}, m_k>
    #   M2[g, k, h*D + d] = (g == h) * m_diff[k, d]   -> r_g @ M2[g] lands in group g's lanes
    eye_g = jnp.eye(G, dtype=jnp.float32)
    m1 = jnp.einsum('gh,kd->ghdk', eye_g, m_diff).reshape(G, Dp, K)
    m2 = jnp.einsum('gh,kd->gkhd', eye_g, m_diff).reshape(G, K, Dp)

    # --- block size: target `block_bytes` of payload per streamed x/out block -----
    # VMEM ~= 4 * tile * Dp * 4 bytes (x + out, double-buffered), lane-dense so no
    # hidden padding; default (4 MiB blocks) -> ~16 MiB, well under the 48 MiB limit.
    if Bp <= 8:
        tile = Bp
    else:
        rows = max(8, block_bytes // (Dp * 4))
        rows = min(rows, max(8, Bp // 2))       # keep >= 2 grid steps (v7x has 2 TCs)
        tile = max(8, (rows // 8) * 8)          # (8,128) rule for the block shape
    grid = (pl.cdiv(Bp, tile),)

    out = pl.pallas_call(
        _gm_score_kernel,
        out_shape=jax.ShapeDtypeStruct((Bp, Dp), out_dtype),
        grid=grid,
        in_specs=[
            pl.BlockSpec(memory_space=pltpu.MemorySpace.SMEM),        # scale scalar
            pl.BlockSpec((tile, Dp), lambda i: (i, 0)),               # packed x (streamed)
            pl.BlockSpec((G, Dp, K), lambda i: (0, 0, 0)),            # M1 (resident)
            pl.BlockSpec((G, K, Dp), lambda i: (0, 0, 0)),            # M2 (resident)
            pl.BlockSpec((1, K), lambda i: (0, 0)),                   # adjusted log-weights
        ],
        out_specs=pl.BlockSpec((tile, Dp), lambda i: (i, 0)),
        compiler_params=pltpu.CompilerParams(
            dimension_semantics=("parallel",),
            vmem_limit_bytes=48 * 1024 * 1024,                        # safe on v7x (64 MiB)
        ),
    )(scale, xp, m1, m2, logw_adj)

    return out.reshape(B, D)


def _reference(x, t, means, weights, alphas_cumprod):
    """Pure-JAX reference (identity covariance) for correctness check."""
    acp = alphas_cumprod[t]
    m = jnp.sqrt(acp) * means                                     # (K, D)
    logw = jnp.log(weights / jnp.sum(weights))                    # (K,)
    diff = x[:, None, :] - m[None, :, :]                          # (B, K, D)
    logits = logw[None, :] - 0.5 * jnp.sum(diff * diff, axis=-1)  # (B, K)
    r = jax.nn.softmax(logits, axis=-1)                           # (B, K)
    grad_logp = r @ m - x                                         # (B, D)
    return -jnp.sqrt(1.0 - acp) * grad_logp


if __name__ == "__main__":
    key = jax.random.PRNGKey(0)
    k_means, k_w, k_x = jax.random.split(key, 3)

    K, D, B, T = 4, 32, 256, 100

    # deterministic synthetic "parameters" (module __init__ args)
    means = 3.0 * jax.random.normal(k_means, (K, D), dtype=jnp.float32)
    weights = jax.random.uniform(k_w, (K,), dtype=jnp.float32, minval=0.5, maxval=2.0)
    betas = jnp.linspace(1e-4, 2e-2, T, dtype=jnp.float32)
    alphas_cumprod = jnp.cumprod(1.0 - betas)

    # inputs
    x = jax.random.normal(k_x, (B, D), dtype=jnp.float32)
    t = jnp.int32(37)

    # default block sizing: B=256, D=32 -> packed (64, 128), tile=32 -> 2 grid steps
    out = epsilon_net_gm(x, t, means, weights, alphas_cumprod)
    out = jax.block_until_ready(out)

    ref = _reference(x, t, means, weights, alphas_cumprod)
    assert out.shape == (B, D) and out.dtype == jnp.float32
    assert jnp.allclose(out, ref, atol=1e-3, rtol=1e-3), "mismatch vs reference"

    print("KERNEL_OK")
</pallas_src>

<mosaic_0001>
module attributes {stable_mosaic.version = 11 : i64} {
  func.func @_gm_score_kernel(%arg0: i32, %arg1: memref<1xf32, #tpu.memory_space<smem>>, %arg2: memref<32x128xf32, #tpu.memory_space<vmem>>, %arg3: memref<4x128x4xf32, #tpu.memory_space<vmem>>, %arg4: memref<4x4x128xf32, #tpu.memory_space<vmem>>, %arg5: memref<1x4xf32, #tpu.memory_space<vmem>>, %arg6: memref<32x128xf32, #tpu.memory_space<vmem>>) attributes {dimension_semantics = [#tpu.dimension_semantics<parallel>], iteration_bounds = array<i64: 2>, scalar_prefetch = 0 : i64, scratch_operands = 0 : i64, tpu.core_type = #tpu.core_type<tc>, window_params = [{transform_indices = @transform_0, window_bounds = array<i64: 1>}, {transform_indices = @transform_1, window_bounds = array<i64: 32, 128>}, {pipeline_mode = #tpu.pipeline_mode<synchronous>, transform_indices = @transform_2, window_bounds = array<i64: 4, 128, 4>}, {pipeline_mode = #tpu.pipeline_mode<synchronous>, transform_indices = @transform_3, window_bounds = array<i64: 4, 4, 128>}, {pipeline_mode = #tpu.pipeline_mode<synchronous>, transform_indices = @transform_4, window_bounds = array<i64: 1, 4>}, {transform_indices = @transform_5, window_bounds = array<i64: 32, 128>}]} {
    %c0 = arith.constant 0 : index
    %0 = memref.load %arg1[%c0] : memref<1xf32, #tpu.memory_space<smem>>
    %c0_0 = arith.constant 0 : index
    %c0_1 = arith.constant 0 : index
    %1 = vector.load %arg2[%c0_0, %c0_1] : memref<32x128xf32, #tpu.memory_space<vmem>>, vector<32x128xf32>
    %c0_2 = arith.constant 0 : index
    %c0_3 = arith.constant 0 : index
    %c0_4 = arith.constant 0 : index
    %2 = vector.load %arg3[%c0_2, %c0_3, %c0_4] : memref<4x128x4xf32, #tpu.memory_space<vmem>>, vector<1x128x4xf32>
    %3 = vector.shape_cast %2 : vector<1x128x4xf32> to vector<128x4xf32>
    %cst = arith.constant dense<0.000000e+00> : vector<32x4xf32>
    %4 = tpu.matmul %1, %3, %cst {dimension_numbers = #tpu.dot_dimension_numbers<[1], [0], [0], [1], [0, 0, 1, 1], [], []>} : vector<32x128xf32>, vector<128x4xf32>, vector<32x4xf32> -> vector<32x4xf32>
    %c0_5 = arith.constant 0 : index
    %c0_6 = arith.constant 0 : index
    %5 = vector.load %arg5[%c0_5, %c0_6] : memref<1x4xf32, #tpu.memory_space<vmem>>, vector<1x4xf32>
    %6 = vector.broadcast %5 : vector<1x4xf32> to vector<32x4xf32>
    %7 = arith.addf %6, %4 : vector<32x4xf32>
    %cst_7 = arith.constant dense<0xFF800000> : vector<32xf32>
    %8 = vector.multi_reduction <maximumf>, %7, %cst_7 [1] : vector<32x4xf32> to vector<32xf32>
    %9 = vector.shape_cast %8 : vector<32xf32> to vector<32x1xf32>
    %10 = vector.broadcast %9 : vector<32x1xf32> to vector<32x4xf32>
    %11 = arith.subf %7, %10 : vector<32x4xf32>
    %12 = math.exp %11 : vector<32x4xf32>
    %cst_8 = arith.constant dense<0.000000e+00> : vector<32xf32>
    %13 = vector.multi_reduction <add>, %12, %cst_8 [1] : vector<32x4xf32> to vector<32xf32>
    %14 = vector.shape_cast %13 : vector<32xf32> to vector<32x1xf32>
    %15 = tpu.reciprocal %14 {approx = true} : vector<32x1xf32> -> vector<32x1xf32>
    %16 = arith.mulf %14, %15 : vector<32x1xf32>
    %cst_9 = arith.constant 2.000000e+00 : f32
    %17 = vector.broadcast %cst_9 : f32 to vector<32x1xf32>
    %18 = arith.subf %17, %16 : vector<32x1xf32>
    %19 = arith.mulf %15, %18 : vector<32x1xf32>
    %20 = vector.broadcast %19 : vector<32x1xf32> to vector<32x4xf32>
    %21 = arith.mulf %12, %20 : vector<32x4xf32>
    %c0_10 = arith.constant 0 : index
    %c0_11 = arith.constant 0 : index
    %c0_12 = arith.constant 0 : index
    %22 = vector.load %arg4[%c0_10, %c0_11, %c0_12] : memref<4x4x128xf32, #tpu.memory_space<vmem>>, vector<1x4x128xf32>
    %23 = vector.shape_cast %22 : vector<1x4x128xf32> to vector<4x128xf32>
    %cst_13 = arith.constant dense<0.000000e+00> : vector<32x128xf32>
    %24 = tpu.matmul %21, %23, %cst_13 {dimension_numbers = #tpu.dot_dimension_numbers<[1], [0], [0], [1], [0, 0, 1, 1], [], []>} : vector<32x4xf32>, vector<4x128xf32>, vector<32x128xf32> -> vector<32x128xf32>
    %c1 = arith.constant 1 : index
    %c0_14 = arith.constant 0 : index
    %c0_15 = arith.constant 0 : index
    %25 = vector.load %arg3[%c1, %c0_14, %c0_15] : memref<4x128x4xf32, #tpu.memory_space<vmem>>, vector<1x128x4xf32>
    %26 = vector.shape_cast %25 : vector<1x128x4xf32> to vector<128x4xf32>
    %cst_16 = arith.constant dense<0.000000e+00> : vector<32x4xf32>
    %27 = tpu.matmul %1, %26, %cst_16 {dimension_numbers = #tpu.dot_dimension_numbers<[1], [0], [0], [1], [0, 0, 1, 1], [], []>} : vector<32x128xf32>, vector<128x4xf32>, vector<32x4xf32> -> vector<32x4xf32>
    %c0_17 = arith.constant 0 : index
    %c0_18 = arith.constant 0 : index
    %28 = vector.load %arg5[%c0_17, %c0_18] : memref<1x4xf32, #tpu.memory_space<vmem>>, vector<1x4xf32>
    %29 = vector.broadcast %28 : vector<1x4xf32> to vector<32x4xf32>
    %30 = arith.addf %29, %27 : vector<32x4xf32>
    %cst_19 = arith.constant dense<0xFF800000> : vector<32xf32>
    %31 = vector.multi_reduction <maximumf>, %30, %cst_19 [1] : vector<32x4xf32> to vector<32xf32>
    %32 = vector.shape_cast %31 : vector<32xf32> to vector<32x1xf32>
    %33 = vector.broadcast %32 : vector<32x1xf32> to vector<32x4xf32>
    %34 = arith.subf %30, %33 : vector<32x4xf32>
    %35 = math.exp %34 : vector<32x4xf32>
    %cst_20 = arith.constant dense<0.000000e+00> : vector<32xf32>
    %36 = vector.multi_reduction <add>, %35, %cst_20 [1] : vector<32x4xf32> to vector<32xf32>
    %37 = vector.shape_cast %36 : vector<32xf32> to vector<32x1xf32>
    %38 = tpu.reciprocal %37 {approx = true} : vector<32x1xf32> -> vector<32x1xf32>
    %39 = arith.mulf %37, %38 : vector<32x1xf32>
    %cst_21 = arith.constant 2.000000e+00 : f32
    %40 = vector.broadcast %cst_21 : f32 to vector<32x1xf32>
    %41 = arith.subf %40, %39 : vector<32x1xf32>
    %42 = arith.mulf %38, %41 : vector<32x1xf32>
    %43 = vector.broadcast %42 : vector<32x1xf32> to vector<32x4xf32>
    %44 = arith.mulf %35, %43 : vector<32x4xf32>
    %c1_22 = arith.constant 1 : index
    %c0_23 = arith.constant 0 : index
    %c0_24 = arith.constant 0 : index
    %45 = vector.load %arg4[%c1_22, %c0_23, %c0_24] : memref<4x4x128xf32, #tpu.memory_space<vmem>>, vector<1x4x128xf32>
    %46 = vector.shape_cast %45 : vector<1x4x128xf32> to vector<4x128xf32>
    %cst_25 = arith.constant dense<0.000000e+00> : vector<32x128xf32>
    %47 = tpu.matmul %44, %46, %cst_25 {dimension_numbers = #tpu.dot_dimension_numbers<[1], [0], [0], [1], [0, 0, 1, 1], [], []>} : vector<32x4xf32>, vector<4x128xf32>, vector<32x128xf32> -> vector<32x128xf32>
    %48 = arith.addf %24, %47 : vector<32x128xf32>
    %c2 = arith.constant 2 : index
    %c0_26 = arith.constant 0 : index
    %c0_27 = arith.constant 0 : index
    %49 = vector.load %arg3[%c2, %c0_26, %c0_27] : memref<4x128x4xf32, #tpu.memory_space<vmem>>, vector<1x128x4xf32>
    %50 = vector.shape_cast %49 : vector<1x128x4xf32> to vector<128x4xf32>
    %cst_28 = arith.constant dense<0.000000e+00> : vector<32x4xf32>
    %51 = tpu.matmul %1, %50, %cst_28 {dimension_numbers = #tpu.dot_dimension_numbers<[1], [0], [0], [1], [0, 0, 1, 1], [], []>} : vector<32x128xf32>, vector<128x4xf32>, vector<32x4xf32> -> vector<32x4xf32>
    %c0_29 = arith.constant 0 : index
    %c0_30 = arith.constant 0 : index
    %52 = vector.load %arg5[%c0_29, %c0_30] : memref<1x4xf32, #tpu.memory_space<vmem>>, vector<1x4xf32>
    %53 = vector.broadcast %52 : vector<1x4xf32> to vector<32x4xf32>
    %54 = arith.addf %53, %51 : vector<32x4xf32>
    %cst_31 = arith.constant dense<0xFF800000> : vector<32xf32>
    %55 = vector.multi_reduction <maximumf>, %54, %cst_31 [1] : vector<32x4xf32> to vector<32xf32>
    %56 = vector.shape_cast %55 : vector<32xf32> to vector<32x1xf32>
    %57 = vector.broadcast %56 : vector<32x1xf32> to vector<32x4xf32>
    %58 = arith.subf %54, %57 : vector<32x4xf32>
    %59 = math.exp %58 : vector<32x4xf32>
    %cst_32 = arith.constant dense<0.000000e+00> : vector<32xf32>
    %60 = vector.multi_reduction <add>, %59, %cst_32 [1] : vector<32x4xf32> to vector<32xf32>
    %61 = vector.shape_cast %60 : vector<32xf32> to vector<32x1xf32>
    %62 = tpu.reciprocal %61 {approx = true} : vector<32x1xf32> -> vector<32x1xf32>
    %63 = arith.mulf %61, %62 : vector<32x1xf32>
    %cst_33 = arith.constant 2.000000e+00 : f32
    %64 = vector.broadcast %cst_33 : f32 to vector<32x1xf32>
    %65 = arith.subf %64, %63 : vector<32x1xf32>
    %66 = arith.mulf %62, %65 : vector<32x1xf32>
    %67 = vector.broadcast %66 : vector<32x1xf32> to vector<32x4xf32>
    %68 = arith.mulf %59, %67 : vector<32x4xf32>
    %c2_34 = arith.constant 2 : index
    %c0_35 = arith.constant 0 : index
    %c0_36 = arith.constant 0 : index
    %69 = vector.load %arg4[%c2_34, %c0_35, %c0_36] : memref<4x4x128xf32, #tpu.memory_space<vmem>>, vector<1x4x128xf32>
    %70 = vector.shape_cast %69 : vector<1x4x128xf32> to vector<4x128xf32>
    %cst_37 = arith.constant dense<0.000000e+00> : vector<32x128xf32>
    %71 = tpu.matmul %68, %70, %cst_37 {dimension_numbers = #tpu.dot_dimension_numbers<[1], [0], [0], [1], [0, 0, 1, 1], [], []>} : vector<32x4xf32>, vector<4x128xf32>, vector<32x128xf32> -> vector<32x128xf32>
    %72 = arith.addf %48, %71 : vector<32x128xf32>
    %c3 = arith.constant 3 : index
    %c0_38 = arith.constant 0 : index
    %c0_39 = arith.constant 0 : index
    %73 = vector.load %arg3[%c3, %c0_38, %c0_39] : memref<4x128x4xf32, #tpu.memory_space<vmem>>, vector<1x128x4xf32>
    %74 = vector.shape_cast %73 : vector<1x128x4xf32> to vector<128x4xf32>
    %cst_40 = arith.constant dense<0.000000e+00> : vector<32x4xf32>
    %75 = tpu.matmul %1, %74, %cst_40 {dimension_numbers = #tpu.dot_dimension_numbers<[1], [0], [0], [1], [0, 0, 1, 1], [], []>} : vector<32x128xf32>, vector<128x4xf32>, vector<32x4xf32> -> vector<32x4xf32>
    %c0_41 = arith.constant 0 : index
    %c0_42 = arith.constant 0 : index
    %76 = vector.load %arg5[%c0_41, %c0_42] : memref<1x4xf32, #tpu.memory_space<vmem>>, vector<1x4xf32>
    %77 = vector.broadcast %76 : vector<1x4xf32> to vector<32x4xf32>
    %78 = arith.addf %77, %75 : vector<32x4xf32>
    %cst_43 = arith.constant dense<0xFF800000> : vector<32xf32>
    %79 = vector.multi_reduction <maximumf>, %78, %cst_43 [1] : vector<32x4xf32> to vector<32xf32>
    %80 = vector.shape_cast %79 : vector<32xf32> to vector<32x1xf32>
    %81 = vector.broadcast %80 : vector<32x1xf32> to vector<32x4xf32>
    %82 = arith.subf %78, %81 : vector<32x4xf32>
    %83 = math.exp %82 : vector<32x4xf32>
    %cst_44 = arith.constant dense<0.000000e+00> : vector<32xf32>
    %84 = vector.multi_reduction <add>, %83, %cst_44 [1] : vector<32x4xf32> to vector<32xf32>
    %85 = vector.shape_cast %84 : vector<32xf32> to vector<32x1xf32>
    %86 = tpu.reciprocal %85 {approx = true} : vector<32x1xf32> -> vector<32x1xf32>
    %87 = arith.mulf %85, %86 : vector<32x1xf32>
    %cst_45 = arith.constant 2.000000e+00 : f32
    %88 = vector.broadcast %cst_45 : f32 to vector<32x1xf32>
    %89 = arith.subf %88, %87 : vector<32x1xf32>
    %90 = arith.mulf %86, %89 : vector<32x1xf32>
    %91 = vector.broadcast %90 : vector<32x1xf32> to vector<32x4xf32>
    %92 = arith.mulf %83, %91 : vector<32x4xf32>
    %c3_46 = arith.constant 3 : index
    %c0_47 = arith.constant 0 : index
    %c0_48 = arith.constant 0 : index
    %93 = vector.load %arg4[%c3_46, %c0_47, %c0_48] : memref<4x4x128xf32, #tpu.memory_space<vmem>>, vector<1x4x128xf32>
    %94 = vector.shape_cast %93 : vector<1x4x128xf32> to vector<4x128xf32>
    %cst_49 = arith.constant dense<0.000000e+00> : vector<32x128xf32>
    %95 = tpu.matmul %92, %94, %cst_49 {dimension_numbers = #tpu.dot_dimension_numbers<[1], [0], [0], [1], [0, 0, 1, 1], [], []>} : vector<32x4xf32>, vector<4x128xf32>, vector<32x128xf32> -> vector<32x128xf32>
    %96 = arith.addf %72, %95 : vector<32x128xf32>
    %97 = arith.subf %96, %1 : vector<32x128xf32>
    %98 = vector.broadcast %0 : f32 to vector<32x128xf32>
    %99 = arith.mulf %98, %97 : vector<32x128xf32>
    %c0_50 = arith.constant 0 : index
    %c0_51 = arith.constant 0 : index
    %100 = vector.load %arg6[%c0_50, %c0_51] : memref<32x128xf32, #tpu.memory_space<vmem>>, vector<32x128xf32>
    tpu.vector_store %arg6[%c0_50, %c0_51], %99 {strides = array<i32>} : memref<32x128xf32, #tpu.memory_space<vmem>>, vector<32x128xf32>,
    return
  }
  func.func @transform_0(%arg0: i32) -> i32 {
    %c0_i32 = arith.constant 0 : i32
    %c0_i32_0 = arith.constant 0 : i32
    return %c0_i32 : i32
  }
  func.func @transform_1(%arg0: i32) -> (i32, i32) {
    %c0_i32 = arith.constant 0 : i32
    %c0_i32_0 = arith.constant 0 : i32
    return %arg0, %c0_i32 : i32, i32
  }
  func.func @transform_2(%arg0: i32) -> (i32, i32, i32) {
    %c0_i32 = arith.constant 0 : i32
    %c0_i32_0 = arith.constant 0 : i32
    %c0_i32_1 = arith.constant 0 : i32
    %c0_i32_2 = arith.constant 0 : i32
    return %c0_i32, %c0_i32_0, %c0_i32_1 : i32, i32, i32
  }
  func.func @transform_3(%arg0: i32) -> (i32, i32, i32) {
    %c0_i32 = arith.constant 0 : i32
    %c0_i32_0 = arith.constant 0 : i32
    %c0_i32_1 = arith.constant 0 : i32
    %c0_i32_2 = arith.constant 0 : i32
    return %c0_i32, %c0_i32_0, %c0_i32_1 : i32, i32, i32
  }
  func.func @transform_4(%arg0: i32) -> (i32, i32) {
    %c0_i32 = arith.constant 0 : i32
    %c0_i32_0 = arith.constant 0 : i32
    %c0_i32_1 = arith.constant 0 : i32
    return %c0_i32, %c0_i32_0 : i32, i32
  }
  func.func @transform_5(%arg0: i32) -> (i32, i32) {
    %c0_i32 = arith.constant 0 : i32
    %c0_i32_0 = arith.constant 0 : i32
    return %arg0, %c0_i32 : i32, i32
  }
}

</mosaic_0001>

<llo_original>
// kernel: tpu_custom_call.1
$region0: #{tpu_custom_call.1}
  #allocation0 [shape = 'u32[]', space=smem, size = 0x4, offset = 0x4, fixed_abs, tag = 'smem constant byte address 0x4 - core index']
  #allocation1 [shape = 'u32[144,128]{1,0:T(1,128)}', space=vmem, size = 0x12000, scoped, tag = 'internal scratch']
  #allocation2 [shape = 'f32[1]{0:T(128)S(6)}', space=smem, size = 0x200, scoped, tag = 'scoped memory for tpu_custom_call.1']
  %s0 = inlined_call_operand.<no memory space> [shape: f32[1], index: 0, kind: input, shape index: {}]
  %s1 = inlined_call_operand.vmem [shape: f32[64,128], index: 1, kind: input, shape index: {}]
  %s2 = inlined_call_operand.vmem [shape: f32[4,128,4], index: 2, kind: input, shape index: {}]
  %s3 = inlined_call_operand.vmem [shape: f32[4,4,128], index: 3, kind: input, shape index: {}]
  %s4 = inlined_call_operand.vmem [shape: f32[1,4], index: 4, kind: input, shape index: {}]
  %s5 = inlined_call_operand.hbm [shape: f32[64,128], index: 5, kind: output, shape index: {}]
  %s6 = sld [smem:[#allocation0]]
  $region53: #{tpu_custom_call.1} parent=0
    _
  %s8 = ssub.s32 1, %s6
  %s9 = scalar_select 0, %s8, %s6
  %10 = sst [smem:[#allocation2]] %s0
  $region1: #{tpu_custom_call.1} parent=0
    #allocation3 [shape = 'u8[32768]{0}', space=vmem, size = 0x8000, scoped, tag = 'output window, operand 0']
    #allocation4 [shape = 's32[2]{0}', space=sflag, size = 0x8, scoped, tag = 'scoped memory for tpu_custom_call.1']
    %11 = vsyncpa [#allocation4], 0
    %s12 = scalar_lea.sflag [#allocation4], 1
    %13 = vsyncpa %s12, 0
    loop: start=0, step=1, limit=4
    $region2: #{tpu_custom_call.1} parent=1 // loop_pre_header
      _
    $region3: #{tpu_custom_call.1} parent=1 // loop_header
      %s15 = sphi 0, %s19
      %p16 = scmp.ge.s32.totalorder %s15, 4
      %s23 = sphi 0, %s23
      %s25 = sphi 0, %s23
      %s26 = sphi 0, %s25
      %s40 = sphi 0, %s26
      %s46 = sphi 0, %s48
      %s49 = sphi 0, %s46
      %s50 = sphi 0, %s49
      %s66 = sphi 0, %s50
      %s70 = sphi 0, %s70
      %s72 = sphi 0, %s70
      %s73 = sphi 0, %s72
      %s87 = sphi 0, %s73
      %s91 = sphi 0, %s91
      %s93 = sphi 0, %s91
      %s94 = sphi 0, %s93
      %s108 = sphi 0, %s94
      %s112 = sphi 0, %s112
      %s114 = sphi 0, %s112
      %s115 = sphi 0, %s114
      %s129 = sphi 0, %s115
      %s135 = sphi 0, %s137
      %s138 = sphi 0, %s135
      %s139 = sphi 0, %s138
      %s155 = sphi 0, %s139
    $region4: #{tpu_custom_call.1} parent=1 // loop_header_branch
      %18 = sbr.rel (%p16) target = $region8
    $region5: #{tpu_custom_call.1} parent=1 // loop_body
      %s20 = ssub.s32 %s15, 1
      %s21 = ssub.s32 %s15, 2
      %s22 = sadd.s32 %s15, 1
      %s24 = sadd.s32 %s23, 1
      %p27 = scmp.eq.s32.totalorder %s15, 1
      %p28 = scmp.ne.s32.totalorder %s23, %s25
      %p29 = scmp.eq.s32.totalorder %s15, 0
      %p30 = por %p28, %p29
      %p31 = scmp.ne.s32.totalorder %s23, %s25
      %p32 = scmp.eq.s32.totalorder %s20, 1
      %p33 = por %p31, %p32
      %p34 = scmp.ne.s32.totalorder %s25, %s26
      %p35 = scmp.eq.s32.totalorder %s20, 0
      %p36 = por %p34, %p35
      %p37 = scmp.ne.s32.totalorder %s25, %s26
      %p38 = scmp.eq.s32.totalorder %s21, 1
      %p39 = por %p37, %p38
      %p41 = scmp.ne.s32.totalorder %s26, %s40
      %p42 = scmp.eq.s32.totalorder %s21, 0
      %p43 = por %p41, %p42
      %s44 = ssub.s32 %s15, %s22
      %p45 = scmp.eq.s32.totalorder %s44, 0
      %s47 = sadd.s32 %s46, 1
      %s48 = scalar_select %p45, %s46, %s47
      %p51 = pneg %p45
      %p52 = scmp.eq.s32.totalorder %s15, 1
      %p53 = por %p51, %p52
      %p54 = scmp.ne.s32.totalorder %s46, %s49
      %p55 = scmp.eq.s32.totalorder %s15, 0
      %p56 = por %p54, %p55
      %p57 = scmp.ne.s32.totalorder %s46, %s49
      %p58 = scmp.eq.s32.totalorder %s20, 1
      %p59 = por %p57, %p58
      %p60 = scmp.ne.s32.totalorder %s49, %s50
      %p61 = scmp.eq.s32.totalorder %s20, 0
      %p62 = por %p60, %p61
      %p63 = scmp.ne.s32.totalorder %s49, %s50
      %p64 = scmp.eq.s32.totalorder %s21, 1
      %p65 = por %p63, %p64
      %p67 = scmp.ne.s32.totalorder %s50, %s66
      %p68 = scmp.eq.s32.totalorder %s21, 0
      %p69 = por %p67, %p68
      %s71 = sadd.s32 %s70, 1
      %p74 = scmp.eq.s32.totalorder %s15, 1
      %p75 = scmp.ne.s32.totalorder %s70, %s72
      %p76 = scmp.eq.s32.totalorder %s15, 0
      %p77 = por %p75, %p76
      %p78 = scmp.ne.s32.totalorder %s70, %s72
      %p79 = scmp.eq.s32.totalorder %s20, 1
      %p80 = por %p78, %p79
      %p81 = scmp.ne.s32.totalorder %s72, %s73
      %p82 = scmp.eq.s32.totalorder %s20, 0
      %p83 = por %p81, %p82
      %p84 = scmp.ne.s32.totalorder %s72, %s73
      %p85 = scmp.eq.s32.totalorder %s21, 1
      %p86 = por %p84, %p85
      %p88 = scmp.ne.s32.totalorder %s73, %s87
      %p89 = scmp.eq.s32.totalorder %s21, 0
      %p90 = por %p88, %p89
      %s92 = sadd.s32 %s91, 1
      %p95 = scmp.eq.s32.totalorder %s15, 1
      %p96 = scmp.ne.s32.totalorder %s91, %s93
      %p97 = scmp.eq.s32.totalorder %s15, 0
      %p98 = por %p96, %p97
      %p99 = scmp.ne.s32.totalorder %s91, %s93
      %p100 = scmp.eq.s32.totalorder %s20, 1
      %p101 = por %p99, %p100
      %p102 = scmp.ne.s32.totalorder %s93, %s94
      %p103 = scmp.eq.s32.totalorder %s20, 0
      %p104 = por %p102, %p103
      %p105 = scmp.ne.s32.totalorder %s93, %s94
      %p106 = scmp.eq.s32.totalorder %s21, 1
      %p107 = por %p105, %p106
      %p109 = scmp.ne.s32.totalorder %s94, %s108
      %p110 = scmp.eq.s32.totalorder %s21, 0
      %p111 = por %p109, %p110
      %s113 = sadd.s32 %s112, 1
      %p116 = scmp.eq.s32.totalorder %s15, 1
      %p117 = scmp.ne.s32.totalorder %s112, %s114
      %p118 = scmp.eq.s32.totalorder %s15, 0
      %p119 = por %p117, %p118
      %p120 = scmp.ne.s32.totalorder %s112, %s114
      %p121 = scmp.eq.s32.totalorder %s20, 1
      %p122 = por %p120, %p121
      %p123 = scmp.ne.s32.totalorder %s114, %s115
      %p124 = scmp.eq.s32.totalorder %s20, 0
      %p125 = por %p123, %p124
      %p126 = scmp.ne.s32.totalorder %s114, %s115
      %p127 = scmp.eq.s32.totalorder %s21, 1
      %p128 = por %p126, %p127
      %p130 = scmp.ne.s32.totalorder %s115, %s129
      %p131 = scmp.eq.s32.totalorder %s21, 0
      %p132 = por %p130, %p131
      %s133 = ssub.s32 %s15, %s22
      %p134 = scmp.eq.s32.totalorder %s133, 0
      %s136 = sadd.s32 %s135, 1
      %s137 = scalar_select %p134, %s135, %s136
      %p140 = pneg %p134
      %p141 = scmp.eq.s32.totalorder %s15, 1
      %p142 = por %p140, %p141
      %p143 = scmp.ne.s32.totalorder %s135, %s138
      %p144 = scmp.eq.s32.totalorder %s15, 0
      %p145 = por %p143, %p144
      %p146 = scmp.ne.s32.totalorder %s135, %s138
      %p147 = scmp.eq.s32.totalorder %s20, 1
      %p148 = por %p146, %p147
      %p149 = scmp.ne.s32.totalorder %s138, %s139
      %p150 = scmp.eq.s32.totalorder %s20, 0
      %p151 = por %p149, %p150
      %p152 = scmp.ne.s32.totalorder %s138, %s139
      %p153 = scmp.eq.s32.totalorder %s21, 1
      %p154 = por %p152, %p153
      %p156 = scmp.ne.s32.totalorder %s139, %s155
      %p157 = scmp.eq.s32.totalorder %s21, 0
      %p158 = por %p156, %p157
      %p159 = scmp.le.s32.totalorder 1, %s15
      %p160 = scmp.lt.s32.totalorder %s15, 3
      %p161 = pnand %p159, %p160
      %p162 = pneg %p161
      // Predicated region
      $region9: #{tpu_custom_call.1} parent=5 // pred_check
        _
      $region10: #{tpu_custom_call.1} parent=5 // pred_check_branch
        %164 = sbr.rel (%p161) target = $region12
      $region11: #{tpu_custom_call.1} parent=5 // pred_region
        %s165 = ssub.s32 %s15, 1
        // Predicated region
        $region13: #{tpu_custom_call.1} parent=11 // pred_check
          %p166 = pneg %p36
        $region14: #{tpu_custom_call.1} parent=11 // pred_check_branch
          %168 = sbr.rel (%p166) target = $region16
        $region15: #{tpu_custom_call.1} parent=11 // pred_region
          _
        $region16: #{tpu_custom_call.1} parent=11 // pred_fallthru
          _
        // Predicated region
        $region17: #{tpu_custom_call.1} parent=11 // pred_check
          %p169 = pneg %p83
        $region18: #{tpu_custom_call.1} parent=11 // pred_check_branch
          %171 = sbr.rel (%p169) target = $region20
        $region19: #{tpu_custom_call.1} parent=11 // pred_region
          _
        $region20: #{tpu_custom_call.1} parent=11 // pred_fallthru
          _
        // Predicated region
        $region21: #{tpu_custom_call.1} parent=11 // pred_check
          %p172 = pneg %p104
        $region22: #{tpu_custom_call.1} parent=11 // pred_check_branch
          %174 = sbr.rel (%p172) target = $region24
        $region23: #{tpu_custom_call.1} parent=11 // pred_region
          _
        $region24: #{tpu_custom_call.1} parent=11 // pred_fallthru
          _
        // Predicated region
        $region25: #{tpu_custom_call.1} parent=11 // pred_check
          %p175 = pneg %p125
        $region26: #{tpu_custom_call.1} parent=11 // pred_check_branch
          %177 = sbr.rel (%p175) target = $region28
        $region27: #{tpu_custom_call.1} parent=11 // pred_region
          _
        $region28: #{tpu_custom_call.1} parent=11 // pred_fallthru
          _
      $region12: #{tpu_custom_call.1} parent=5 // pred_fallthru
        _
      %p178 = scmp.lt.s32.totalorder %s15, 2
      // Predicated region
      $region29: #{tpu_custom_call.1} parent=5 // pred_check
        %p179 = pneg %p178
      $region30: #{tpu_custom_call.1} parent=5 // pred_check_branch
        %181 = sbr.rel (%p179) target = $region32
      $region31: #{tpu_custom_call.1} parent=5 // pred_region
        // Predicated region
        $region33: #{tpu_custom_call.1} parent=31 // pred_check
          %p182 = pneg %p56
        $region34: #{tpu_custom_call.1} parent=31 // pred_check_branch
          %184 = sbr.rel (%p182) target = $region36
        $region35: #{tpu_custom_call.1} parent=31 // pred_region
          %s185 = smul.u32 4, %s15
          %p186 = scmp.lt.s32.totalorder %s185, 7
          %s187 = scalar_select %p186, %s185, 7
          %s188 = smul.addr %s187, 8
          %s189 = scalar_lea.vmem %s1, %s188
          %s190 = smul.u32 4, %s15
        $region36: #{tpu_custom_call.1} parent=31 // pred_fallthru
          _
      $region32: #{tpu_custom_call.1} parent=5 // pred_fallthru
        _
      %p191 = scmp.le.s32.totalorder 1, %s15
      %p192 = scmp.lt.s32.totalorder %s15, 3
      %p193 = pnand %p191, %p192
      %p194 = pneg %p193
      // Predicated region
      $region37: #{tpu_custom_call.1} parent=5 // pred_check
        _
      $region38: #{tpu_custom_call.1} parent=5 // pred_check_branch
        %196 = sbr.rel (%p193) target = $region40
      $region39: #{tpu_custom_call.1} parent=5 // pred_region
        %s197 = ssub.s32 %s15, 1
        %p198 = pneg %p36
        %p199 = pneg %p33
        %s200 = smul.u32 4, %s20
        %p201 = scmp.lt.s32.totalorder %s200, 7
        %s202 = scalar_select %p201, %s200, 7
        %s203 = smul.addr %s202, 8
        %s204 = scalar_lea.vmem %s1, %s203
        %p205 = pneg %p62
        %p206 = pneg %p59
        %p207 = pneg %p83
        %p208 = pneg %p80
        %p209 = pneg %p104
        %p210 = pneg %p101
        %p211 = pneg %p125
        %p212 = pneg %p122
        %p213 = pneg %p151
        %p214 = pneg %p148
        %s215 = sand.u32 %s138, 1
        %s216 = scalar_lea.sflag [#allocation4], %s215
        %s217 = sand.u32 %s138, 1
        %s218 = smul.addr %s217, 32
        %s219 = scalar_lea.vmem [#allocation3], %s218
        %s220 = smul.u32 4, %s20
        %p221 = scmp.lt.s32.totalorder %s220, 7
        %s222 = scalar_select %p221, %s220, 7
        %s223 = smul.addr %s222, 8
        %s224 = scalar_lea.vmem %s1, %s223
        %s225 = smul.u32 4, %s20
        %s226 = smul.u32 4, %s20
        %s227 = sld [smem:[#allocation2]]
        %v228 = vld [vmem:[%s224] sm:$0xff]
        %v229 = vld [vmem:[%s224 + $0x8] sm:$0xff]
        %v230 = vld [vmem:[%s224 + $0x10] sm:$0xff]
        %v231 = vld [vmem:[%s224 + $0x18] sm:$0xff]
        %v232 = vld [vmem:[%s2] sm:$0xff]
        %v233 = vld [vmem:[%s2 + $0x8] sm:$0xff]
        %v234 = vld [vmem:[%s2 + $0x10] sm:$0xff]
        %v235 = vld [vmem:[%s2 + $0x18] sm:$0xff]
        %v236 = vld [vmem:[%s2 + $0x20] sm:$0xff]
        %v237 = vld [vmem:[%s2 + $0x28] sm:$0xff]
        %v238 = vld [vmem:[%s2 + $0x30] sm:$0xff]
        %v239 = vld [vmem:[%s2 + $0x38] sm:$0xff]
        %v240 = vld [vmem:[%s2 + $0x40] sm:$0xff]
        %v241 = vld [vmem:[%s2 + $0x48] sm:$0xff]
        %v242 = vld [vmem:[%s2 + $0x50] sm:$0xff]
        %v243 = vld [vmem:[%s2 + $0x58] sm:$0xff]
        %v244 = vld [vmem:[%s2 + $0x60] sm:$0xff]
        %v245 = vld [vmem:[%s2 + $0x68] sm:$0xff]
        %v246 = vld [vmem:[%s2 + $0x70] sm:$0xff]
        %v247 = vld [vmem:[%s2 + $0x78] sm:$0xff]
        %248 = vmatprep.subr.mxu0 0.0
        %249 = vmatpush1.msra.mxu0 %v232
        %250 = vmatprep.subr.mxu0 0.0
        %251 = vmatpush1.msra.mxu0 %v233
        %252 = vmatprep.subr.mxu0 0.0
        %253 = vmatpush1.msra.mxu0 %v234
        %254 = vmatprep.subr.mxu0 0.0
        %255 = vmatpush1.msra.mxu0 %v235
        %256 = vmatprep.subr.mxu0 0.0
        %257 = vmatpush1.msra.mxu0 %v236
        %258 = vmatprep.subr.mxu0 0.0
        %259 = vmatpush1.msra.mxu0 %v237
        %260 = vmatprep.subr.mxu0 0.0
        %261 = vmatpush1.msra.mxu0 %v238
        %262 = vmatprep.subr.mxu0 0.0
        %263 = vmatpush1.msra.mxu0 %v239
        %264 = vmatprep.subr.mxu0 0.0
        %265 = vmatpush1.msra.mxu0 %v240
        %266 = vmatprep.subr.mxu0 0.0
        %267 = vmatpush1.msra.mxu0 %v241
        %268 = vmatprep.subr.mxu0 0.0
        %269 = vmatpush1.msra.mxu0 %v242
        %270 = vmatprep.subr.mxu0 0.0
        %271 = vmatpush1.msra.mxu0 %v243
        %272 = vmatprep.subr.mxu0 0.0
        %273 = vmatpush1.msra.mxu0 %v244
        %274 = vmatprep.subr.mxu0 0.0
        %275 = vmatpush1.msra.mxu0 %v245
        %276 = vmatprep.subr.mxu0 0.0
        %277 = vmatpush1.msra.mxu0 %v246
        %278 = vmatprep.subr.mxu0 0.0
        %279 = vmatpush1.msra.mxu0 %v247
        %280 = vmatprep.subr.mxu0 0.0
        %281 = vmatpush1.msra.mxu0 0.0
        %282 = vmatprep.subr.mxu0 0.0
        %283 = vmatpush1.msra.mxu0 0.0
        %284 = vmatprep.subr.mxu0 0.0
        %285 = vmatpush1.msra.mxu0 0.0
        %286 = vmatprep.subr.mxu0 0.0
        %287 = vmatpush1.msra.mxu0 0.0
        %288 = vmatprep.subr.mxu0 0.0
        %289 = vmatpush1.msra.mxu0 0.0
        %290 = vmatprep.subr.mxu0 0.0
        %291 = vmatpush1.msra.mxu0 0.0
        %292 = vmatprep.subr.mxu0 0.0
        %293 = vmatpush1.msra.mxu0 0.0
        %294 = vmatprep.subr.mxu0 0.0
        %295 = vmatpush1.msra.mxu0 0.0
        %296 = vmatprep.subr.mxu0 0.0
        %297 = vmatpush1.msra.mxu0 0.0
        %298 = vmatprep.subr.mxu0 0.0
        %299 = vmatpush1.msra.mxu0 0.0
        %300 = vmatprep.subr.mxu0 0.0
        %301 = vmatpush1.msra.mxu0 0.0
        %302 = vmatprep.subr.mxu0 0.0
        %303 = vmatpush1.msra.mxu0 0.0
        %304 = vmatprep.subr.mxu0 0.0
        %305 = vmatpush1.msra.mxu0 0.0
        %306 = vmatprep.subr.mxu0 0.0
        %307 = vmatpush1.msra.mxu0 0.0
        %308 = vmatprep.subr.mxu0 0.0
        %309 = vmatpush1.msra.mxu0 0.0
        %310 = vmatprep.subr.mxu0 0.0
        %311 = vmatpush1.msra.mxu0 0.0
        %312 = vmatprep.mubr.f32.mxu0 0.0
        %313 = vmatmul.mubr.f32.gmra.mrb[0].mxu0 %v228
        %v314 = vpop.f32.mrb[0].mxu0
        %v315 = vadd.f32 0.0, %v314
        %v316 = vpop.f32.mrb[0].mxu0
        %317 = vmatprep.mubr.f32.mxu0 0.0
        %318 = vmatmul.mubr.f32.gmra.mrb[0].mxu0 %v229
        %v319 = vpop.f32.mrb[0].mxu0
        %v320 = vadd.f32 0.0, %v319
        %v321 = vpop.f32.mrb[0].mxu0
        %322 = vmatprep.mubr.f32.mxu0 0.0
        %323 = vmatmul.mubr.f32.gmra.mrb[0].mxu0 %v230
        %v324 = vpop.f32.mrb[0].mxu0
        %v325 = vadd.f32 0.0, %v324
        %v326 = vpop.f32.mrb[0].mxu0
        %327 = vmatprep.mubr.f32.mxu0 0.0
        %328 = vmatmul.mubr.f32.gmra.mrb[0].mxu0 %v231
        %v329 = vpop.f32.mrb[0].mxu0
        %v330 = vadd.f32 0.0, %v329
        %v331 = vpop.f32.mrb[0].mxu0
        %332 = vdwg.mxu0
        %v333 = vld [vmem:[%s4] sm:$0x1]
        %v335 = vlaneseq
        %v336 = vshrl.u32 %v335, 7
        %v337 = vsub.s32 0, %v336
        %v338 = vrot.slane %v333, %v337
        %v340 = vadd.f32 %v338, %v315
        %v341 = vadd.f32 %v338, %v320
        %v342 = vadd.f32 %v338, %v325
        %v343 = vadd.f32 %v338, %v330
        %vm344 = vcmask 31744
        %v345 = vsel %vm344, %v340, -inf
        %346 = vmax.xlane.f32.xlu0 %v345
        %v347 = vpop.xlane.xlu0 %346
        %v348 = vsel %vm344, %v341, -inf
        %349 = vmax.xlane.f32.xlu0 %v348
        %v350 = vpop.xlane.xlu0 %349
        %v351 = vsel %vm344, %v342, -inf
        %352 = vmax.xlane.f32.xlu0 %v351
        %v353 = vpop.xlane.xlu0 %352
        %v354 = vsel %vm344, %v343, -inf
        %355 = vmax.xlane.f32.xlu0 %v354
        %v356 = vpop.xlane.xlu0 %355
        %v357 = vsub.f32 %v340, %v347
        %v358 = vsub.f32 %v341, %v350
        %v359 = vsub.f32 %v342, %v353
        %v360 = vsub.f32 %v343, %v356
        %v361 = vmul.f32 %v357, 1.442695
        %v362 = vpow.pop %v361
        %v363 = vmul.f32 %v358, 1.442695
        %v364 = vpow.pop %v363
        %v365 = vmul.f32 %v359, 1.442695
        %v366 = vpow.pop %v365
        %v367 = vmul.f32 %v360, 1.442695
        %v368 = vpow.pop %v367
        %v369 = vsel %vm344, %v362, 0.0
        %370 = vadd.xlane.f32.xlu0 %v369
        %v371 = vpop.xlane.xlu0 %370
        %v372 = vsel %vm344, %v364, 0.0
        %373 = vadd.xlane.f32.xlu0 %v372
        %v374 = vpop.xlane.xlu0 %373
        %v375 = vsel %vm344, %v366, 0.0
        %376 = vadd.xlane.f32.xlu0 %v375
        %v377 = vpop.xlane.xlu0 %376
        %v378 = vsel %vm344, %v368, 0.0
        %379 = vadd.xlane.f32.xlu0 %v378
        %v380 = vpop.xlane.xlu0 %379
        %v381 = vrcp.pop %v371
        %v382 = vrcp.pop %v374
        %v383 = vrcp.pop %v377
        %v384 = vrcp.pop %v380
        %v385 = vmul.f32 %v371, %v381
        %v386 = vmul.f32 %v374, %v382
        %v387 = vmul.f32 %v377, %v383
        %v388 = vmul.f32 %v380, %v384
        %v389 = vsub.f32 2.0, %v385
        %v390 = vsub.f32 2.0, %v386
        %v391 = vsub.f32 2.0, %v387
        %v392 = vsub.f32 2.0, %v388
        %v393 = vmul.f32 %v381, %v389
        %v394 = vmul.f32 %v382, %v390
        %v395 = vmul.f32 %v383, %v391
        %v396 = vmul.f32 %v384, %v392
        %v397 = vmul.f32 %v362, %v393
        %v398 = vmul.f32 %v364, %v394
        %v399 = vmul.f32 %v366, %v395
        %v400 = vmul.f32 %v368, %v396
        %v401 = vld [vmem:[%s3] sm:$0xf]
        %s402 = scalar_lea.vmem %s2, 128
        %v403 = vld [vmem:[%s402] sm:$0xff]
        %v404 = vld [vmem:[%s402 + $0x8] sm:$0xff]
        %v405 = vld [vmem:[%s402 + $0x10] sm:$0xff]
        %v406 = vld [vmem:[%s402 + $0x18] sm:$0xff]
        %v407 = vld [vmem:[%s402 + $0x20] sm:$0xff]
        %v408 = vld [vmem:[%s402 + $0x28] sm:$0xff]
        %v409 = vld [vmem:[%s402 + $0x30] sm:$0xff]
        %v410 = vld [vmem:[%s402 + $0x38] sm:$0xff]
        %v411 = vld [vmem:[%s402 + $0x40] sm:$0xff]
        %v412 = vld [vmem:[%s402 + $0x48] sm:$0xff]
        %v413 = vld [vmem:[%s402 + $0x50] sm:$0xff]
        %v414 = vld [vmem:[%s402 + $0x58] sm:$0xff]
        %v415 = vld [vmem:[%s402 + $0x60] sm:$0xff]
        %v416 = vld [vmem:[%s402 + $0x68] sm:$0xff]
        %v417 = vld [vmem:[%s402 + $0x70] sm:$0xff]
        %v418 = vld [vmem:[%s402 + $0x78] sm:$0xff]
        %419 = vmatprep.subr.mxu0 0.0
        %420 = vmatpush1.msra.mxu0 %v403
        %421 = vmatprep.subr.mxu0 0.0
        %422 = vmatpush1.msra.mxu0 %v404
        %423 = vmatprep.subr.mxu0 0.0
        %424 = vmatpush1.msra.mxu0 %v405
        %425 = vmatprep.subr.mxu0 0.0
        %426 = vmatpush1.msra.mxu0 %v406
        %427 = vmatprep.subr.mxu0 0.0
        %428 = vmatpush1.msra.mxu0 %v407
        %429 = vmatprep.subr.mxu0 0.0
        %430 = vmatpush1.msra.mxu0 %v408
        %431 = vmatprep.subr.mxu0 0.0
        %432 = vmatpush1.msra.mxu0 %v409
        %433 = vmatprep.subr.mxu0 0.0
        %434 = vmatpush1.msra.mxu0 %v410
        %435 = vmatprep.subr.mxu0 0.0
        %436 = vmatpush1.msra.mxu0 %v411
        %437 = vmatprep.subr.mxu0 0.0
        %438 = vmatpush1.msra.mxu0 %v412
        %439 = vmatprep.subr.mxu0 0.0
        %440 = vmatpush1.msra.mxu0 %v413
        %441 = vmatprep.subr.mxu0 0.0
        %442 = vmatpush1.msra.mxu0 %v414
        %443 = vmatprep.subr.mxu0 0.0
        %444 = vmatpush1.msra.mxu0 %v415
        %445 = vmatprep.subr.mxu0 0.0
        %446 = vmatpush1.msra.mxu0 %v416
        %447 = vmatprep.subr.mxu0 0.0
        %448 = vmatpush1.msra.mxu0 %v417
        %449 = vmatprep.subr.mxu0 0.0
        %450 = vmatpush1.msra.mxu0 %v418
        %451 = vmatprep.subr.mxu0 0.0
        %452 = vmatpush1.msra.mxu0 0.0
        %453 = vmatprep.subr.mxu0 0.0
        %454 = vmatpush1.msra.mxu0 0.0
        %455 = vmatprep.subr.mxu0 0.0
        %456 = vmatpush1.msra.mxu0 0.0
        %457 = vmatprep.subr.mxu0 0.0
        %458 = vmatpush1.msra.mxu0 0.0
        %459 = vmatprep.subr.mxu0 0.0
        %460 = vmatpush1.msra.mxu0 0.0
        %461 = vmatprep.subr.mxu0 0.0
        %462 = vmatpush1.msra.mxu0 0.0
        %463 = vmatprep.subr.mxu0 0.0
        %464 = vmatpush1.msra.mxu0 0.0
        %465 = vmatprep.subr.mxu0 0.0
        %466 = vmatpush1.msra.mxu0 0.0
        %467 = vmatprep.subr.mxu0 0.0
        %468 = vmatpush1.msra.mxu0 0.0
        %469 = vmatprep.subr.mxu0 0.0
        %470 = vmatpush1.msra.mxu0 0.0
        %471 = vmatprep.subr.mxu0 0.0
        %472 = vmatpush1.msra.mxu0 0.0
        %473 = vmatprep.subr.mxu0 0.0
        %474 = vmatpush1.msra.mxu0 0.0
        %475 = vmatprep.subr.mxu0 0.0
        %476 = vmatpush1.msra.mxu0 0.0
        %477 = vmatprep.subr.mxu0 0.0
        %478 = vmatpush1.msra.mxu0 0.0
        %479 = vmatprep.subr.mxu0 0.0
        %480 = vmatpush1.msra.mxu0 0.0
        %481 = vmatprep.subr.mxu0 0.0
        %482 = vmatpush1.msra.mxu0 0.0
        %483 = vmatprep.mubr.f32.mxu0 0.0
        %484 = vmatmul.mubr.f32.gmra.mrb[0].mxu0 %v228
        %v485 = vpop.f32.mrb[0].mxu0
        %v486 = vadd.f32 0.0, %v485
        %v487 = vpop.f32.mrb[0].mxu0
        %488 = vmatprep.mubr.f32.mxu0 0.0
        %489 = vmatmul.mubr.f32.gmra.mrb[0].mxu0 %v229
        %v490 = vpop.f32.mrb[0].mxu0
        %v491 = vadd.f32 0.0, %v490
        %v492 = vpop.f32.mrb[0].mxu0
        %493 = vmatprep.mubr.f32.mxu0 0.0
        %494 = vmatmul.mubr.f32.gmra.mrb[0].mxu0 %v230
        %v495 = vpop.f32.mrb[0].mxu0
        %v496 = vadd.f32 0.0, %v495
        %v497 = vpop.f32.mrb[0].mxu0
        %498 = vmatprep.mubr.f32.mxu0 0.0
        %499 = vmatmul.mubr.f32.gmra.mrb[0].mxu0 %v231
        %v500 = vpop.f32.mrb[0].mxu0
        %v501 = vadd.f32 0.0, %v500
        %v502 = vpop.f32.mrb[0].mxu0
        %503 = vdwg.mxu0
        %v504 = vadd.f32 %v338, %v486
        %v505 = vadd.f32 %v338, %v491
        %v506 = vadd.f32 %v338, %v496
        %v507 = vadd.f32 %v338, %v501
        %v508 = vsel %vm344, %v504, -inf
        %509 = vmax.xlane.f32.xlu0 %v508
        %v510 = vpop.xlane.xlu0 %509
        %v511 = vsel %vm344, %v505, -inf
        %512 = vmax.xlane.f32.xlu0 %v511
        %v513 = vpop.xlane.xlu0 %512
        %v514 = vsel %vm344, %v506, -inf
        %515 = vmax.xlane.f32.xlu0 %v514
        %v516 = vpop.xlane.xlu0 %515
        %v517 = vsel %vm344, %v507, -inf
        %518 = vmax.xlane.f32.xlu0 %v517
        %v519 = vpop.xlane.xlu0 %518
        %v520 = vsub.f32 %v504, %v510
        %v521 = vsub.f32 %v505, %v513
        %v522 = vsub.f32 %v506, %v516
        %v523 = vsub.f32 %v507, %v519
        %v524 = vmul.f32 %v520, 1.442695
        %v525 = vpow.pop %v524
        %v526 = vmul.f32 %v521, 1.442695
        %v527 = vpow.pop %v526
        %v528 = vmul.f32 %v522, 1.442695
        %v529 = vpow.pop %v528
        %v530 = vmul.f32 %v523, 1.442695
        %v531 = vpow.pop %v530
        %v532 = vsel %vm344, %v525, 0.0
        %533 = vadd.xlane.f32.xlu0 %v532
        %v534 = vpop.xlane.xlu0 %533
        %v535 = vsel %vm344, %v527, 0.0
        %536 = vadd.xlane.f32.xlu0 %v535
        %v537 = vpop.xlane.xlu0 %536
        %v538 = vsel %vm344, %v529, 0.0
        %539 = vadd.xlane.f32.xlu0 %v538
        %v540 = vpop.xlane.xlu0 %539
        %v541 = vsel %vm344, %v531, 0.0
        %542 = vadd.xlane.f32.xlu0 %v541
        %v543 = vpop.xlane.xlu0 %542
        %v544 = vrcp.pop %v534
        %v545 = vrcp.pop %v537
        %v546 = vrcp.pop %v540
        %v547 = vrcp.pop %v543
        %v548 = vmul.f32 %v534, %v544
        %v549 = vmul.f32 %v537, %v545
        %v550 = vmul.f32 %v540, %v546
        %v551 = vmul.f32 %v543, %v547
        %v552 = vsub.f32 2.0, %v548
        %v553 = vsub.f32 2.0, %v549
        %v554 = vsub.f32 2.0, %v550
        %v555 = vsub.f32 2.0, %v551
        %v556 = vmul.f32 %v544, %v552
        %v557 = vmul.f32 %v545, %v553
        %v558 = vmul.f32 %v546, %v554
        %v559 = vmul.f32 %v547, %v555
        %v560 = vmul.f32 %v525, %v556
        %v561 = vmul.f32 %v527, %v557
        %v562 = vmul.f32 %v529, %v558
        %v563 = vmul.f32 %v531, %v559
        %s564 = scalar_lea.vmem %s3, 4
        %v565 = vld [vmem:[%s564] sm:$0xf]
        %v567 = vsel %vm344, %v560, 0
        %v570 = vsel %vm344, %v561, 0
        %v573 = vsel %vm344, %v562, 0
        %v576 = vsel %vm344, %v563, 0
        %vm578 = vcmask 1043456
        %v580 = vsel %vm578, %v565, 0
        %582 = vmatprep.subr.mxu0 0.0
        %583 = vmatpush1.msra.mxu0 %v580
        %584 = vmatprep.subr.mxu0 0.0
        %585 = vmatpush1.msra.mxu0 0.0
        %586 = vmatprep.subr.mxu0 0.0
        %587 = vmatpush1.msra.mxu0 0.0
        %588 = vmatprep.subr.mxu0 0.0
        %589 = vmatpush1.msra.mxu0 0.0
        %590 = vmatprep.subr.mxu0 0.0
        %591 = vmatpush1.msra.mxu0 0.0
        %592 = vmatprep.subr.mxu0 0.0
        %593 = vmatpush1.msra.mxu0 0.0
        %594 = vmatprep.subr.mxu0 0.0
        %595 = vmatpush1.msra.mxu0 0.0
        %596 = vmatprep.subr.mxu0 0.0
        %597 = vmatpush1.msra.mxu0 0.0
        %598 = vmatprep.subr.mxu0 0.0
        %599 = vmatpush1.msra.mxu0 0.0
        %600 = vmatprep.subr.mxu0 0.0
        %601 = vmatpush1.msra.mxu0 0.0
        %602 = vmatprep.subr.mxu0 0.0
        %603 = vmatpush1.msra.mxu0 0.0
        %604 = vmatprep.subr.mxu0 0.0
        %605 = vmatpush1.msra.mxu0 0.0
        %606 = vmatprep.subr.mxu0 0.0
        %607 = vmatpush1.msra.mxu0 0.0
        %608 = vmatprep.subr.mxu0 0.0
        %609 = vmatpush1.msra.mxu0 0.0
        %610 = vmatprep.subr.mxu0 0.0
        %611 = vmatpush1.msra.mxu0 0.0
        %612 = vmatprep.subr.mxu0 0.0
        %613 = vmatpush1.msra.mxu0 0.0
        %614 = vmatprep.subr.mxu0 0.0
        %615 = vmatpush1.msra.mxu0 0.0
        %616 = vmatprep.subr.mxu0 0.0
        %617 = vmatpush1.msra.mxu0 0.0
        %618 = vmatprep.subr.mxu0 0.0
        %619 = vmatpush1.msra.mxu0 0.0
        %620 = vmatprep.subr.mxu0 0.0
        %621 = vmatpush1.msra.mxu0 0.0
        %622 = vmatprep.subr.mxu0 0.0
        %623 = vmatpush1.msra.mxu0 0.0
        %624 = vmatprep.subr.mxu0 0.0
        %625 = vmatpush1.msra.mxu0 0.0
        %626 = vmatprep.subr.mxu0 0.0
        %627 = vmatpush1.msra.mxu0 0.0
        %628 = vmatprep.subr.mxu0 0.0
        %629 = vmatpush1.msra.mxu0 0.0
        %630 = vmatprep.subr.mxu0 0.0
        %631 = vmatpush1.msra.mxu0 0.0
        %632 = vmatprep.subr.mxu0 0.0
        %633 = vmatpush1.msra.mxu0 0.0
        %634 = vmatprep.subr.mxu0 0.0
        %635 = vmatpush1.msra.mxu0 0.0
        %636 = vmatprep.subr.mxu0 0.0
        %637 = vmatpush1.msra.mxu0 0.0
        %638 = vmatprep.subr.mxu0 0.0
        %639 = vmatpush1.msra.mxu0 0.0
        %640 = vmatprep.subr.mxu0 0.0
        %641 = vmatpush1.msra.mxu0 0.0
        %642 = vmatprep.subr.mxu0 0.0
        %643 = vmatpush1.msra.mxu0 0.0
        %644 = vmatprep.subr.mxu0 0.0
        %645 = vmatpush1.msra.mxu0 0.0
        %646 = vmatprep.mubr.f32.mxu0 0.0
        %647 = vmatmul.mubr.f32.gmra.mrb[0].mxu0 %v567
        %v648 = vpop.f32.mrb[0].mxu0
        %v649 = vadd.f32 0.0, %v648
        %v650 = vpop.f32.mrb[0].mxu0
        %651 = vmatprep.mubr.f32.mxu0 0.0
        %652 = vmatmul.mubr.f32.gmra.mrb[0].mxu0 %v570
        %v653 = vpop.f32.mrb[0].mxu0
        %v654 = vadd.f32 0.0, %v653
        %v655 = vpop.f32.mrb[0].mxu0
        %656 = vmatprep.mubr.f32.mxu0 0.0
        %657 = vmatmul.mubr.f32.gmra.mrb[0].mxu0 %v573
        %v658 = vpop.f32.mrb[0].mxu0
        %v659 = vadd.f32 0.0, %v658
        %v660 = vpop.f32.mrb[0].mxu0
        %661 = vmatprep.mubr.f32.mxu0 0.0
        %662 = vmatmul.mubr.f32.gmra.mrb[0].mxu0 %v576
        %v663 = vpop.f32.mrb[0].mxu0
        %v664 = vadd.f32 0.0, %v663
        %v665 = vpop.f32.mrb[0].mxu0
        %666 = vdwg.mxu0
        %v668 = vsel %vm344, %v397, 0
        %v671 = vsel %vm344, %v398, 0
        %v674 = vsel %vm344, %v399, 0
        %v677 = vsel %vm344, %v400, 0
        %v680 = vsel %vm578, %v401, 0
        %682 = vmatprep.subr.mxu0 0.0
        %683 = vmatpush1.msra.mxu0 %v680
        %684 = vmatprep.subr.mxu0 0.0
        %685 = vmatpush1.msra.mxu0 0.0
        %686 = vmatprep.subr.mxu0 0.0
        %687 = vmatpush1.msra.mxu0 0.0
        %688 = vmatprep.subr.mxu0 0.0
        %689 = vmatpush1.msra.mxu0 0.0
        %690 = vmatprep.subr.mxu0 0.0
        %691 = vmatpush1.msra.mxu0 0.0
        %692 = vmatprep.subr.mxu0 0.0
        %693 = vmatpush1.msra.mxu0 0.0
        %694 = vmatprep.subr.mxu0 0.0
        %695 = vmatpush1.msra.mxu0 0.0
        %696 = vmatprep.subr.mxu0 0.0
        %697 = vmatpush1.msra.mxu0 0.0
        %698 = vmatprep.subr.mxu0 0.0
        %699 = vmatpush1.msra.mxu0 0.0
        %700 = vmatprep.subr.mxu0 0.0
        %701 = vmatpush1.msra.mxu0 0.0
        %702 = vmatprep.subr.mxu0 0.0
        %703 = vmatpush1.msra.mxu0 0.0
        %704 = vmatprep.subr.mxu0 0.0
        %705 = vmatpush1.msra.mxu0 0.0
        %706 = vmatprep.subr.mxu0 0.0
        %707 = vmatpush1.msra.mxu0 0.0
        %708 = vmatprep.subr.mxu0 0.0
        %709 = vmatpush1.msra.mxu0 0.0
        %710 = vmatprep.subr.mxu0 0.0
        %711 = vmatpush1.msra.mxu0 0.0
        %712 = vmatprep.subr.mxu0 0.0
        %713 = vmatpush1.msra.mxu0 0.0
        %714 = vmatprep.subr.mxu0 0.0
        %715 = vmatpush1.msra.mxu0 0.0
        %716 = vmatprep.subr.mxu0 0.0
        %717 = vmatpush1.msra.mxu0 0.0
        %718 = vmatprep.subr.mxu0 0.0
        %719 = vmatpush1.msra.mxu0 0.0
        %720 = vmatprep.subr.mxu0 0.0
        %721 = vmatpush1.msra.mxu0 0.0
        %722 = vmatprep.subr.mxu0 0.0
        %723 = vmatpush1.msra.mxu0 0.0
        %724 = vmatprep.subr.mxu0 0.0
        %725 = vmatpush1.msra.mxu0 0.0
        %726 = vmatprep.subr.mxu0 0.0
        %727 = vmatpush1.msra.mxu0 0.0
        %728 = vmatprep.subr.mxu0 0.0
        %729 = vmatpush1.msra.mxu0 0.0
        %730 = vmatprep.subr.mxu0 0.0
        %731 = vmatpush1.msra.mxu0 0.0
        %732 = vmatprep.subr.mxu0 0.0
        %733 = vmatpush1.msra.mxu0 0.0
        %734 = vmatprep.subr.mxu0 0.0
        %735 = vmatpush1.msra.mxu0 0.0
        %736 = vmatprep.subr.mxu0 0.0
        %737 = vmatpush1.msra.mxu0 0.0
        %738 = vmatprep.subr.mxu0 0.0
        %739 = vmatpush1.msra.mxu0 0.0
        %740 = vmatprep.subr.mxu0 0.0
        %741 = vmatpush1.msra.mxu0 0.0
        %742 = vmatprep.subr.mxu0 0.0
        %743 = vmatpush1.msra.mxu0 0.0
        %744 = vmatprep.subr.mxu0 0.0
        %745 = vmatpush1.msra.mxu0 0.0
        %746 = vmatprep.mubr.f32.mxu0 0.0
        %747 = vmatmul.mubr.f32.gmra.mrb[0].mxu0 %v668
        %v748 = vpop.f32.mrb[0].mxu0
        %v749 = vadd.f32 %v649, %v748
        %v750 = vpop.f32.mrb[0].mxu0
        %751 = vmatprep.mubr.f32.mxu0 0.0
        %752 = vmatmul.mubr.f32.gmra.mrb[0].mxu0 %v671
        %v753 = vpop.f32.mrb[0].mxu0
        %v754 = vadd.f32 %v654, %v753
        %v755 = vpop.f32.mrb[0].mxu0
        %756 = vmatprep.mubr.f32.mxu0 0.0
        %757 = vmatmul.mubr.f32.gmra.mrb[0].mxu0 %v674
        %v758 = vpop.f32.mrb[0].mxu0
        %v759 = vadd.f32 %v659, %v758
        %v760 = vpop.f32.mrb[0].mxu0
        %761 = vmatprep.mubr.f32.mxu0 0.0
        %762 = vmatmul.mubr.f32.gmra.mrb[0].mxu0 %v677
        %v763 = vpop.f32.mrb[0].mxu0
        %v764 = vadd.f32 %v664, %v763
        %v765 = vpop.f32.mrb[0].mxu0
        %766 = vdwg.mxu0
        %s767 = scalar_lea.vmem %s2, 256
        %v768 = vld [vmem:[%s767] sm:$0xff]
        %v769 = vld [vmem:[%s767 + $0x8] sm:$0xff]
        %v770 = vld [vmem:[%s767 + $0x10] sm:$0xff]
        %v771 = vld [vmem:[%s767 + $0x18] sm:$0xff]
        %v772 = vld [vmem:[%s767 + $0x20] sm:$0xff]
        %v773 = vld [vmem:[%s767 + $0x28] sm:$0xff]
        %v774 = vld [vmem:[%s767 + $0x30] sm:$0xff]
        %v775 = vld [vmem:[%s767 + $0x38] sm:$0xff]
        %v776 = vld [vmem:[%s767 + $0x40] sm:$0xff]
        %v777 = vld [vmem:[%s767 + $0x48] sm:$0xff]
        %v778 = vld [vmem:[%s767 + $0x50] sm:$0xff]
        %v779 = vld [vmem:[%s767 + $0x58] sm:$0xff]
        %v780 = vld [vmem:[%s767 + $0x60] sm:$0xff]
        %v781 = vld [vmem:[%s767 + $0x68] sm:$0xff]
        %v782 = vld [vmem:[%s767 + $0x70] sm:$0xff]
        %v783 = vld [vmem:[%s767 + $0x78] sm:$0xff]
        %784 = vmatprep.subr.mxu0 0.0
        %785 = vmatpush1.msra.mxu0 %v768
        %786 = vmatprep.subr.mxu0 0.0
        %787 = vmatpush1.msra.mxu0 %v769
        %788 = vmatprep.subr.mxu0 0.0
        %789 = vmatpush1.msra.mxu0 %v770
        %790 = vmatprep.subr.mxu0 0.0
        %791 = vmatpush1.msra.mxu0 %v771
        %792 = vmatprep.subr.mxu0 0.0
        %793 = vmatpush1.msra.mxu0 %v772
        %794 = vmatprep.subr.mxu0 0.0
        %795 = vmatpush1.msra.mxu0 %v773
        %796 = vmatprep.subr.mxu0 0.0
        %797 = vmatpush1.msra.mxu0 %v774
        %798 = vmatprep.subr.mxu0 0.0
        %799 = vmatpush1.msra.mxu0 %v775
        %800 = vmatprep.subr.mxu0 0.0
        %801 = vmatpush1.msra.mxu0 %v776
        %802 = vmatprep.subr.mxu0 0.0
        %803 = vmatpush1.msra.mxu0 %v777
        %804 = vmatprep.subr.mxu0 0.0
        %805 = vmatpush1.msra.mxu0 %v778
        %806 = vmatprep.subr.mxu0 0.0
        %807 = vmatpush1.msra.mxu0 %v779
        %808 = vmatprep.subr.mxu0 0.0
        %809 = vmatpush1.msra.mxu0 %v780
        %810 = vmatprep.subr.mxu0 0.0
        %811 = vmatpush1.msra.mxu0 %v781
        %812 = vmatprep.subr.mxu0 0.0
        %813 = vmatpush1.msra.mxu0 %v782
        %814 = vmatprep.subr.mxu0 0.0
        %815 = vmatpush1.msra.mxu0 %v783
        %816 = vmatprep.subr.mxu0 0.0
        %817 = vmatpush1.msra.mxu0 0.0
        %818 = vmatprep.subr.mxu0 0.0
        %819 = vmatpush1.msra.mxu0 0.0
        %820 = vmatprep.subr.mxu0 0.0
        %821 = vmatpush1.msra.mxu0 0.0
        %822 = vmatprep.subr.mxu0 0.0
        %823 = vmatpush1.msra.mxu0 0.0
        %824 = vmatprep.subr.mxu0 0.0
        %825 = vmatpush1.msra.mxu0 0.0
        %826 = vmatprep.subr.mxu0 0.0
        %827 = vmatpush1.msra.mxu0 0.0
        %828 = vmatprep.subr.mxu0 0.0
        %829 = vmatpush1.msra.mxu0 0.0
        %830 = vmatprep.subr.mxu0 0.0
        %831 = vmatpush1.msra.mxu0 0.0
        %832 = vmatprep.subr.mxu0 0.0
        %833 = vmatpush1.msra.mxu0 0.0
        %834 = vmatprep.subr.mxu0 0.0
        %835 = vmatpush1.msra.mxu0 0.0
        %836 = vmatprep.subr.mxu0 0.0
        %837 = vmatpush1.msra.mxu0 0.0
        %838 = vmatprep.subr.mxu0 0.0
        %839 = vmatpush1.msra.mxu0 0.0
        %840 = vmatprep.subr.mxu0 0.0
        %841 = vmatpush1.msra.mxu0 0.0
        %842 = vmatprep.subr.mxu0 0.0
        %843 = vmatpush1.msra.mxu0 0.0
        %844 = vmatprep.subr.mxu0 0.0
        %845 = vmatpush1.msra.mxu0 0.0
        %846 = vmatprep.subr.mxu0 0.0
        %847 = vmatpush1.msra.mxu0 0.0
        %848 = vmatprep.mubr.f32.mxu0 0.0
        %849 = vmatmul.mubr.f32.gmra.mrb[0].mxu0 %v228
        %v850 = vpop.f32.mrb[0].mxu0
        %v851 = vadd.f32 0.0, %v850
        %v852 = vpop.f32.mrb[0].mxu0
        %853 = vmatprep.mubr.f32.mxu0 0.0
        %854 = vmatmul.mubr.f32.gmra.mrb[0].mxu0 %v229
        %v855 = vpop.f32.mrb[0].mxu0
        %v856 = vadd.f32 0.0, %v855
        %v857 = vpop.f32.mrb[0].mxu0
        %858 = vmatprep.mubr.f32.mxu0 0.0
        %859 = vmatmul.mubr.f32.gmra.mrb[0].mxu0 %v230
        %v860 = vpop.f32.mrb[0].mxu0
        %v861 = vadd.f32 0.0, %v860
        %v862 = vpop.f32.mrb[0].mxu0
        %863 = vmatprep.mubr.f32.mxu0 0.0
        %864 = vmatmul.mubr.f32.gmra.mrb[0].mxu0 %v231
        %v865 = vpop.f32.mrb[0].mxu0
        %v866 = vadd.f32 0.0, %v865
        %v867 = vpop.f32.mrb[0].mxu0
        %868 = vdwg.mxu0
        %v869 = vadd.f32 %v338, %v851
        %v870 = vadd.f32 %v338, %v856
        %v871 = vadd.f32 %v338, %v861
        %v872 = vadd.f32 %v338, %v866
        %v873 = vsel %vm344, %v869, -inf
        %874 = vmax.xlane.f32.xlu0 %v873
        %v875 = vpop.xlane.xlu0 %874
        %v876 = vsel %vm344, %v870, -inf
        %877 = vmax.xlane.f32.xlu0 %v876
        %v878 = vpop.xlane.xlu0 %877
        %v879 = vsel %vm344, %v871, -inf
        %880 = vmax.xlane.f32.xlu0 %v879
        %v881 = vpop.xlane.xlu0 %880
        %v882 = vsel %vm344, %v872, -inf
        %883 = vmax.xlane.f32.xlu0 %v882
        %v884 = vpop.xlane.xlu0 %883
        %v885 = vsub.f32 %v869, %v875
        %v886 = vsub.f32 %v870, %v878
        %v887 = vsub.f32 %v871, %v881
        %v888 = vsub.f32 %v872, %v884
        %v889 = vmul.f32 %v885, 1.442695
        %v890 = vpow.pop %v889
        %v891 = vmul.f32 %v886, 1.442695
        %v892 = vpow.pop %v891
        %v893 = vmul.f32 %v887, 1.442695
        %v894 = vpow.pop %v893
        %v895 = vmul.f32 %v888, 1.442695
        %v896 = vpow.pop %v895
        %v897 = vsel %vm344, %v890, 0.0
        %898 = vadd.xlane.f32.xlu0 %v897
        %v899 = vpop.xlane.xlu0 %898
        %v900 = vsel %vm344, %v892, 0.0
        %901 = vadd.xlane.f32.xlu0 %v900
        %v902 = vpop.xlane.xlu0 %901
        %v903 = vsel %vm344, %v894, 0.0
        %904 = vadd.xlane.f32.xlu0 %v903
        %v905 = vpop.xlane.xlu0 %904
        %v906 = vsel %vm344, %v896, 0.0
        %907 = vadd.xlane.f32.xlu0 %v906
        %v908 = vpop.xlane.xlu0 %907
        %v909 = vrcp.pop %v899
        %v910 = vrcp.pop %v902
        %v911 = vrcp.pop %v905
        %v912 = vrcp.pop %v908
        %v913 = vmul.f32 %v899, %v909
        %v914 = vmul.f32 %v902, %v910
        %v915 = vmul.f32 %v905, %v911
        %v916 = vmul.f32 %v908, %v912
        %v917 = vsub.f32 2.0, %v913
        %v918 = vsub.f32 2.0, %v914
        %v919 = vsub.f32 2.0, %v915
        %v920 = vsub.f32 2.0, %v916
        %v921 = vmul.f32 %v909, %v917
        %v922 = vmul.f32 %v910, %v918
        %v923 = vmul.f32 %v911, %v919
        %v924 = vmul.f32 %v912, %v920
        %v925 = vmul.f32 %v890, %v921
        %v926 = vmul.f32 %v892, %v922
        %v927 = vmul.f32 %v894, %v923
        %v928 = vmul.f32 %v896, %v924
        %s929 = scalar_lea.vmem %s3, 8
        %v930 = vld [vmem:[%s929] sm:$0xf]
        %v932 = vsel %vm344, %v925, 0
        %v935 = vsel %vm344, %v926, 0
        %v938 = vsel %vm344, %v927, 0
        %v941 = vsel %vm344, %v928, 0
        %v944 = vsel %vm578, %v930, 0
        %946 = vmatprep.subr.mxu0 0.0
        %947 = vmatpush1.msra.mxu0 %v944
        %948 = vmatprep.subr.mxu0 0.0
        %949 = vmatpush1.msra.mxu0 0.0
        %950 = vmatprep.subr.mxu0 0.0
        %951 = vmatpush1.msra.mxu0 0.0
        %952 = vmatprep.subr.mxu0 0.0
        %953 = vmatpush1.msra.mxu0 0.0
        %954 = vmatprep.subr.mxu0 0.0
        %955 = vmatpush1.msra.mxu0 0.0
        %956 = vmatprep.subr.mxu0 0.0
        %957 = vmatpush1.msra.mxu0 0.0
        %958 = vmatprep.subr.mxu0 0.0
        %959 = vmatpush1.msra.mxu0 0.0
        %960 = vmatprep.subr.mxu0 0.0
        %961 = vmatpush1.msra.mxu0 0.0
        %962 = vmatprep.subr.mxu0 0.0
        %963 = vmatpush1.msra.mxu0 0.0
        %964 = vmatprep.subr.mxu0 0.0
        %965 = vmatpush1.msra.mxu0 0.0
        %966 = vmatprep.subr.mxu0 0.0
        %967 = vmatpush1.msra.mxu0 0.0
        %968 = vmatprep.subr.mxu0 0.0
        %969 = vmatpush1.msra.mxu0 0.0
        %970 = vmatprep.subr.mxu0 0.0
        %971 = vmatpush1.msra.mxu0 0.0
        %972 = vmatprep.subr.mxu0 0.0
        %973 = vmatpush1.msra.mxu0 0.0
        %974 = vmatprep.subr.mxu0 0.0
        %975 = vmatpush1.msra.mxu0 0.0
        %976 = vmatprep.subr.mxu0 0.0
        %977 = vmatpush1.msra.mxu0 0.0
        %978 = vmatprep.subr.mxu0 0.0
        %979 = vmatpush1.msra.mxu0 0.0
        %980 = vmatprep.subr.mxu0 0.0
        %981 = vmatpush1.msra.mxu0 0.0
        %982 = vmatprep.subr.mxu0 0.0
        %983 = vmatpush1.msra.mxu0 0.0
        %984 = vmatprep.subr.mxu0 0.0
        %985 = vmatpush1.msra.mxu0 0.0
        %986 = vmatprep.subr.mxu0 0.0
        %987 = vmatpush1.msra.mxu0 0.0
        %988 = vmatprep.subr.mxu0 0.0
        %989 = vmatpush1.msra.mxu0 0.0
        %990 = vmatprep.subr.mxu0 0.0
        %991 = vmatpush1.msra.mxu0 0.0
        %992 = vmatprep.subr.mxu0 0.0
        %993 = vmatpush1.msra.mxu0 0.0
        %994 = vmatprep.subr.mxu0 0.0
        %995 = vmatpush1.msra.mxu0 0.0
        %996 = vmatprep.subr.mxu0 0.0
        %997 = vmatpush1.msra.mxu0 0.0
        %998 = vmatprep.subr.mxu0 0.0
        %999 = vmatpush1.msra.mxu0 0.0
        %1000 = vmatprep.subr.mxu0 0.0
        %1001 = vmatpush1.msra.mxu0 0.0
        %1002 = vmatprep.subr.mxu0 0.0
        %1003 = vmatpush1.msra.mxu0 0.0
        %1004 = vmatprep.subr.mxu0 0.0
        %1005 = vmatpush1.msra.mxu0 0.0
        %1006 = vmatprep.subr.mxu0 0.0
        %1007 = vmatpush1.msra.mxu0 0.0
        %1008 = vmatprep.subr.mxu0 0.0
        %1009 = vmatpush1.msra.mxu0 0.0
        %1010 = vmatprep.mubr.f32.mxu0 0.0
        %1011 = vmatmul.mubr.f32.gmra.mrb[0].mxu0 %v932
        %v1012 = vpop.f32.mrb[0].mxu0
        %v1013 = vadd.f32 0.0, %v1012
        %v1014 = vpop.f32.mrb[0].mxu0
        %1015 = vmatprep.mubr.f32.mxu0 0.0
        %1016 = vmatmul.mubr.f32.gmra.mrb[0].mxu0 %v935
        %v1017 = vpop.f32.mrb[0].mxu0
        %v1018 = vadd.f32 0.0, %v1017
        %v1019 = vpop.f32.mrb[0].mxu0
        %1020 = vmatprep.mubr.f32.mxu0 0.0
        %1021 = vmatmul.mubr.f32.gmra.mrb[0].mxu0 %v938
        %v1022 = vpop.f32.mrb[0].mxu0
        %v1023 = vadd.f32 0.0, %v1022
        %v1024 = vpop.f32.mrb[0].mxu0
        %1025 = vmatprep.mubr.f32.mxu0 0.0
        %1026 = vmatmul.mubr.f32.gmra.mrb[0].mxu0 %v941
        %v1027 = vpop.f32.mrb[0].mxu0
        %v1028 = vadd.f32 0.0, %v1027
        %v1029 = vpop.f32.mrb[0].mxu0
        %1030 = vdwg.mxu0
        %v1031 = vadd.f32 %v749, %v1013
        %v1032 = vadd.f32 %v754, %v1018
        %v1033 = vadd.f32 %v759, %v1023
        %v1034 = vadd.f32 %v764, %v1028
        %s1035 = scalar_lea.vmem %s2, 384
        %v1036 = vld [vmem:[%s1035] sm:$0xff]
        %v1037 = vld [vmem:[%s1035 + $0x8] sm:$0xff]
        %v1038 = vld [vmem:[%s1035 + $0x10] sm:$0xff]
        %v1039 = vld [vmem:[%s1035 + $0x18] sm:$0xff]
        %v1040 = vld [vmem:[%s1035 + $0x20] sm:$0xff]
        %v1041 = vld [vmem:[%s1035 + $0x28] sm:$0xff]
        %v1042 = vld [vmem:[%s1035 + $0x30] sm:$0xff]
        %v1043 = vld [vmem:[%s1035 + $0x38] sm:$0xff]
        %v1044 = vld [vmem:[%s1035 + $0x40] sm:$0xff]
        %v1045 = vld [vmem:[%s1035 + $0x48] sm:$0xff]
        %v1046 = vld [vmem:[%s1035 + $0x50] sm:$0xff]
        %v1047 = vld [vmem:[%s1035 + $0x58] sm:$0xff]
        %v1048 = vld [vmem:[%s1035 + $0x60] sm:$0xff]
        %v1049 = vld [vmem:[%s1035 + $0x68] sm:$0xff]
        %v1050 = vld [vmem:[%s1035 + $0x70] sm:$0xff]
        %v1051 = vld [vmem:[%s1035 + $0x78] sm:$0xff]
        %1052 = vmatprep.subr.mxu0 0.0
        %1053 = vmatpush1.msra.mxu0 %v1036
        %1054 = vmatprep.subr.mxu0 0.0
        %1055 = vmatpush1.msra.mxu0 %v1037
        %1056 = vmatprep.subr.mxu0 0.0
        %1057 = vmatpush1.msra.mxu0 %v1038
        %1058 = vmatprep.subr.mxu0 0.0
        %1059 = vmatpush1.msra.mxu0 %v1039
        %1060 = vmatprep.subr.mxu0 0.0
        %1061 = vmatpush1.msra.mxu0 %v1040
        %1062 = vmatprep.subr.mxu0 0.0
        %1063 = vmatpush1.msra.mxu0 %v1041
        %1064 = vmatprep.subr.mxu0 0.0
        %1065 = vmatpush1.msra.mxu0 %v1042
        %1066 = vmatprep.subr.mxu0 0.0
        %1067 = vmatpush1.msra.mxu0 %v1043
        %1068 = vmatprep.subr.mxu0 0.0
        %1069 = vmatpush1.msra.mxu0 %v1044
        %1070 = vmatprep.subr.mxu0 0.0
        %1071 = vmatpush1.msra.mxu0 %v1045
        %1072 = vmatprep.subr.mxu0 0.0
        %1073 = vmatpush1.msra.mxu0 %v1046
        %1074 = vmatprep.subr.mxu0 0.0
        %1075 = vmatpush1.msra.mxu0 %v1047
        %1076 = vmatprep.subr.mxu0 0.0
        %1077 = vmatpush1.msra.mxu0 %v1048
        %1078 = vmatprep.subr.mxu0 0.0
        %1079 = vmatpush1.msra.mxu0 %v1049
        %1080 = vmatprep.subr.mxu0 0.0
        %1081 = vmatpush1.msra.mxu0 %v1050
        %1082 = vmatprep.subr.mxu0 0.0
        %1083 = vmatpush1.msra.mxu0 %v1051
        %1084 = vmatprep.subr.mxu0 0.0
        %1085 = vmatpush1.msra.mxu0 0.0
        %1086 = vmatprep.subr.mxu0 0.0
        %1087 = vmatpush1.msra.mxu0 0.0
        %1088 = vmatprep.subr.mxu0 0.0
        %1089 = vmatpush1.msra.mxu0 0.0
        %1090 = vmatprep.subr.mxu0 0.0
        %1091 = vmatpush1.msra.mxu0 0.0
        %1092 = vmatprep.subr.mxu0 0.0
        %1093 = vmatpush1.msra.mxu0 0.0
        %1094 = vmatprep.subr.mxu0 0.0
        %1095 = vmatpush1.msra.mxu0 0.0
        %1096 = vmatprep.subr.mxu0 0.0
        %1097 = vmatpush1.msra.mxu0 0.0
        %1098 = vmatprep.subr.mxu0 0.0
        %1099 = vmatpush1.msra.mxu0 0.0
        %1100 = vmatprep.subr.mxu0 0.0
        %1101 = vmatpush1.msra.mxu0 0.0
        %1102 = vmatprep.subr.mxu0 0.0
        %1103 = vmatpush1.msra.mxu0 0.0
        %1104 = vmatprep.subr.mxu0 0.0
        %1105 = vmatpush1.msra.mxu0 0.0
        %1106 = vmatprep.subr.mxu0 0.0
        %1107 = vmatpush1.msra.mxu0 0.0
        %1108 = vmatprep.subr.mxu0 0.0
        %1109 = vmatpush1.msra.mxu0 0.0
        %1110 = vmatprep.subr.mxu0 0.0
        %1111 = vmatpush1.msra.mxu0 0.0
        %1112 = vmatprep.subr.mxu0 0.0
        %1113 = vmatpush1.msra.mxu0 0.0
        %1114 = vmatprep.subr.mxu0 0.0
        %1115 = vmatpush1.msra.mxu0 0.0
        %1116 = vmatprep.mubr.f32.mxu0 0.0
        %1117 = vmatmul.mubr.f32.gmra.mrb[0].mxu0 %v228
        %v1118 = vpop.f32.mrb[0].mxu0
        %v1119 = vadd.f32 0.0, %v1118
        %v1120 = vpop.f32.mrb[0].mxu0
        %1121 = vmatprep.mubr.f32.mxu0 0.0
        %1122 = vmatmul.mubr.f32.gmra.mrb[0].mxu0 %v229
        %v1123 = vpop.f32.mrb[0].mxu0
        %v1124 = vadd.f32 0.0, %v1123
        %v1125 = vpop.f32.mrb[0].mxu0
        %1126 = vmatprep.mubr.f32.mxu0 0.0
        %1127 = vmatmul.mubr.f32.gmra.mrb[0].mxu0 %v230
        %v1128 = vpop.f32.mrb[0].mxu0
        %v1129 = vadd.f32 0.0, %v1128
        %v1130 = vpop.f32.mrb[0].mxu0
        %1131 = vmatprep.mubr.f32.mxu0 0.0
        %1132 = vmatmul.mubr.f32.gmra.mrb[0].mxu0 %v231
        %v1133 = vpop.f32.mrb[0].mxu0
        %v1134 = vadd.f32 0.0, %v1133
        %v1135 = vpop.f32.mrb[0].mxu0
        %1136 = vdwg.mxu0
        %v1137 = vadd.f32 %v338, %v1119
        %v1138 = vadd.f32 %v338, %v1124
        %v1139 = vadd.f32 %v338, %v1129
        %v1140 = vadd.f32 %v338, %v1134
        %v1141 = vsel %vm344, %v1137, -inf
        %1142 = vmax.xlane.f32.xlu0 %v1141
        %v1143 = vpop.xlane.xlu0 %1142
        %v1144 = vsel %vm344, %v1138, -inf
        %1145 = vmax.xlane.f32.xlu0 %v1144
        %v1146 = vpop.xlane.xlu0 %1145
        %v1147 = vsel %vm344, %v1139, -inf
        %1148 = vmax.xlane.f32.xlu0 %v1147
        %v1149 = vpop.xlane.xlu0 %1148
        %v1150 = vsel %vm344, %v1140, -inf
        %1151 = vmax.xlane.f32.xlu0 %v1150
        %v1152 = vpop.xlane.xlu0 %1151
        %v1153 = vsub.f32 %v1137, %v1143
        %v1154 = vsub.f32 %v1138, %v1146
        %v1155 = vsub.f32 %v1139, %v1149
        %v1156 = vsub.f32 %v1140, %v1152
        %v1157 = vmul.f32 %v1153, 1.442695
        %v1158 = vpow.pop %v1157
        %v1159 = vmul.f32 %v1154, 1.442695
        %v1160 = vpow.pop %v1159
        %v1161 = vmul.f32 %v1155, 1.442695
        %v1162 = vpow.pop %v1161
        %v1163 = vmul.f32 %v1156, 1.442695
        %v1164 = vpow.pop %v1163
        %v1165 = vsel %vm344, %v1158, 0.0
        %1166 = vadd.xlane.f32.xlu0 %v1165
        %v1167 = vpop.xlane.xlu0 %1166
        %v1168 = vsel %vm344, %v1160, 0.0
        %1169 = vadd.xlane.f32.xlu0 %v1168
        %v1170 = vpop.xlane.xlu0 %1169
        %v1171 = vsel %vm344, %v1162, 0.0
        %1172 = vadd.xlane.f32.xlu0 %v1171
        %v1173 = vpop.xlane.xlu0 %1172
        %v1174 = vsel %vm344, %v1164, 0.0
        %1175 = vadd.xlane.f32.xlu0 %v1174
        %v1176 = vpop.xlane.xlu0 %1175
        %v1177 = vrcp.pop %v1167
        %v1178 = vrcp.pop %v1170
        %v1179 = vrcp.pop %v1173
        %v1180 = vrcp.pop %v1176
        %v1181 = vmul.f32 %v1167, %v1177
        %v1182 = vmul.f32 %v1170, %v1178
        %v1183 = vmul.f32 %v1173, %v1179
        %v1184 = vmul.f32 %v1176, %v1180
        %v1185 = vsub.f32 2.0, %v1181
        %v1186 = vsub.f32 2.0, %v1182
        %v1187 = vsub.f32 2.0, %v1183
        %v1188 = vsub.f32 2.0, %v1184
        %v1189 = vmul.f32 %v1177, %v1185
        %v1190 = vmul.f32 %v1178, %v1186
        %v1191 = vmul.f32 %v1179, %v1187
        %v1192 = vmul.f32 %v1180, %v1188
        %v1193 = vmul.f32 %v1158, %v1189
        %v1194 = vmul.f32 %v1160, %v1190
        %v1195 = vmul.f32 %v1162, %v1191
        %v1196 = vmul.f32 %v1164, %v1192
        %s1197 = scalar_lea.vmem %s3, 12
        %v1198 = vld [vmem:[%s1197] sm:$0xf]
        %v1200 = vsel %vm344, %v1193, 0
        %v1203 = vsel %vm344, %v1194, 0
        %v1206 = vsel %vm344, %v1195, 0
        %v1209 = vsel %vm344, %v1196, 0
        %v1212 = vsel %vm578, %v1198, 0
        %1214 = vmatprep.subr.mxu0 0.0
        %1215 = vmatpush1.msra.mxu0 %v1212
        %1216 = vmatprep.subr.mxu0 0.0
        %1217 = vmatpush1.msra.mxu0 0.0
        %1218 = vmatprep.subr.mxu0 0.0
        %1219 = vmatpush1.msra.mxu0 0.0
        %1220 = vmatprep.subr.mxu0 0.0
        %1221 = vmatpush1.msra.mxu0 0.0
        %1222 = vmatprep.subr.mxu0 0.0
        %1223 = vmatpush1.msra.mxu0 0.0
        %1224 = vmatprep.subr.mxu0 0.0
        %1225 = vmatpush1.msra.mxu0 0.0
        %1226 = vmatprep.subr.mxu0 0.0
        %1227 = vmatpush1.msra.mxu0 0.0
        %1228 = vmatprep.subr.mxu0 0.0
        %1229 = vmatpush1.msra.mxu0 0.0
        %1230 = vmatprep.subr.mxu0 0.0
        %1231 = vmatpush1.msra.mxu0 0.0
        %1232 = vmatprep.subr.mxu0 0.0
        %1233 = vmatpush1.msra.mxu0 0.0
        %1234 = vmatprep.subr.mxu0 0.0
        %1235 = vmatpush1.msra.mxu0 0.0
        %1236 = vmatprep.subr.mxu0 0.0
        %1237 = vmatpush1.msra.mxu0 0.0
        %1238 = vmatprep.subr.mxu0 0.0
        %1239 = vmatpush1.msra.mxu0 0.0
        %1240 = vmatprep.subr.mxu0 0.0
        %1241 = vmatpush1.msra.mxu0 0.0
        %1242 = vmatprep.subr.mxu0 0.0
        %1243 = vmatpush1.msra.mxu0 0.0
        %1244 = vmatprep.subr.mxu0 0.0
        %1245 = vmatpush1.msra.mxu0 0.0
        %1246 = vmatprep.subr.mxu0 0.0
        %1247 = vmatpush1.msra.mxu0 0.0
        %1248 = vmatprep.subr.mxu0 0.0
        %1249 = vmatpush1.msra.mxu0 0.0
        %1250 = vmatprep.subr.mxu0 0.0
        %1251 = vmatpush1.msra.mxu0 0.0
        %1252 = vmatprep.subr.mxu0 0.0
        %1253 = vmatpush1.msra.mxu0 0.0
        %1254 = vmatprep.subr.mxu0 0.0
        %1255 = vmatpush1.msra.mxu0 0.0
        %1256 = vmatprep.subr.mxu0 0.0
        %1257 = vmatpush1.msra.mxu0 0.0
        %1258 = vmatprep.subr.mxu0 0.0
        %1259 = vmatpush1.msra.mxu0 0.0
        %1260 = vmatprep.subr.mxu0 0.0
        %1261 = vmatpush1.msra.mxu0 0.0
        %1262 = vmatprep.subr.mxu0 0.0
        %1263 = vmatpush1.msra.mxu0 0.0
        %1264 = vmatprep.subr.mxu0 0.0
        %1265 = vmatpush1.msra.mxu0 0.0
        %1266 = vmatprep.subr.mxu0 0.0
        %1267 = vmatpush1.msra.mxu0 0.0
        %1268 = vmatprep.subr.mxu0 0.0
        %1269 = vmatpush1.msra.mxu0 0.0
        %1270 = vmatprep.subr.mxu0 0.0
        %1271 = vmatpush1.msra.mxu0 0.0
        %1272 = vmatprep.subr.mxu0 0.0
        %1273 = vmatpush1.msra.mxu0 0.0
        %1274 = vmatprep.subr.mxu0 0.0
        %1275 = vmatpush1.msra.mxu0 0.0
        %1276 = vmatprep.subr.mxu0 0.0
        %1277 = vmatpush1.msra.mxu0 0.0
        %1278 = vmatprep.mubr.f32.mxu0 0.0
        %1279 = vmatmul.mubr.f32.gmra.mrb[0].mxu0 %v1200
        %v1280 = vpop.f32.mrb[0].mxu0
        %v1281 = vadd.f32 0.0, %v1280
        %v1282 = vpop.f32.mrb[0].mxu0
        %1283 = vmatprep.mubr.f32.mxu0 0.0
        %1284 = vmatmul.mubr.f32.gmra.mrb[0].mxu0 %v1203
        %v1285 = vpop.f32.mrb[0].mxu0
        %v1286 = vadd.f32 0.0, %v1285
        %v1287 = vpop.f32.mrb[0].mxu0
        %1288 = vmatprep.mubr.f32.mxu0 0.0
        %1289 = vmatmul.mubr.f32.gmra.mrb[0].mxu0 %v1206
        %v1290 = vpop.f32.mrb[0].mxu0
        %v1291 = vadd.f32 0.0, %v1290
        %v1292 = vpop.f32.mrb[0].mxu0
        %1293 = vmatprep.mubr.f32.mxu0 0.0
        %1294 = vmatmul.mubr.f32.gmra.mrb[0].mxu0 %v1209
        %v1295 = vpop.f32.mrb[0].mxu0
        %v1296 = vadd.f32 0.0, %v1295
        %v1297 = vpop.f32.mrb[0].mxu0
        %1298 = vdwg.mxu0
        %v1299 = vadd.f32 %v1031, %v1281
        %v1300 = vadd.f32 %v1032, %v1286
        %v1301 = vadd.f32 %v1033, %v1291
        %v1302 = vadd.f32 %v1034, %v1296
        %v1303 = vsub.f32 %v1299, %v228
        %v1304 = vsub.f32 %v1300, %v229
        %v1305 = vsub.f32 %v1301, %v230
        %v1306 = vsub.f32 %v1302, %v231
        %v1307 = vstv %s227
        %v1308 = vmul.f32 %v1307, %v1303
        %v1309 = vmul.f32 %v1307, %v1304
        %v1310 = vmul.f32 %v1307, %v1305
        %v1311 = vmul.f32 %v1307, %v1306
        %1312 = vst [vmem:[%s219] sm:$0xff] %v1308
        %1313 = vst [vmem:[%s219 + $0x8] sm:$0xff] %v1309
        %1314 = vst [vmem:[%s219 + $0x10] sm:$0xff] %v1310
        %1315 = vst [vmem:[%s219 + $0x18] sm:$0xff] %v1311
        %s1316 = sand.u32 %s138, 1
        %s1317 = scalar_lea.sflag [#allocation4], %s1316
        %s1318 = sand.u32 %s138, 1
        %s1319 = smul.addr %s1318, 32
        %s1320 = scalar_lea.vmem [#allocation3], %s1319
        // Predicated region
        $region41: #{tpu_custom_call.1} parent=39 // pred_check
          %p1321 = pneg %p148
        $region42: #{tpu_custom_call.1} parent=39 // pred_check_branch
          %1323 = sbr.rel (%p1321) target = $region44
        $region43: #{tpu_custom_call.1} parent=39 // pred_region
          %s1324 = smul.u32 4, %s20
          %s1326 = ssub.s32 512, 512
          %1327 = vsyncadd %s1317, %s1326
          %s1328 = smul.addr %s1324, 128
          %s1329 = scalar_lea.hbm %s5, %s1328
          %s1330 = sshll.u32 %s1320, 4
          %s1331 = int_to_ptr.vmem [resolvable:$true] %s1330
          %1336 = dma.vmem_to_hbm [thread:$0]  %s1331, 512, %s1329, %s1317, 128, 128, 8
        $region44: #{tpu_custom_call.1} parent=39 // pred_fallthru
          _
      $region40: #{tpu_custom_call.1} parent=5 // pred_fallthru
        _
      %p1337 = scmp.le.s32.totalorder 2, %s15
      // Predicated region
      $region45: #{tpu_custom_call.1} parent=5 // pred_check
        %p1338 = pneg %p1337
      $region46: #{tpu_custom_call.1} parent=5 // pred_check_branch
        %1340 = sbr.rel (%p1338) target = $region48
      $region47: #{tpu_custom_call.1} parent=5 // pred_region
        %s1341 = ssub.s32 %s15, 2
        // Predicated region
        $region49: #{tpu_custom_call.1} parent=47 // pred_check
          %p1342 = pneg %p154
        $region50: #{tpu_custom_call.1} parent=47 // pred_check_branch
          %1344 = sbr.rel (%p1342) target = $region52
        $region51: #{tpu_custom_call.1} parent=47 // pred_region
          %s1345 = sand.u32 %s139, 1
          %s1346 = scalar_lea.sflag [#allocation4], %s1345
          %s1347 = sand.u32 %s139, 1
          %s1348 = smul.addr %s1347, 32
          %s1349 = scalar_lea.vmem [#allocation3], %s1348
          %1350 = dma.done %s1346, 512
        $region52: #{tpu_custom_call.1} parent=47 // pred_fallthru
          _
      $region48: #{tpu_custom_call.1} parent=5 // pred_fallthru
        _
    $region6: #{tpu_custom_call.1} parent=1 // loop_footer
      %s19 = sadd.s32 1, %s15
    $region7: #{tpu_custom_call.1} parent=1 // loop_footer_branch
      %14 = sbr.rel target = $region3
    $region8: #{tpu_custom_call.1} parent=1 // loop_exit
      _
    %1351 = vsyncpa [#allocation4], 1
    %s1352 = scalar_lea.sflag [#allocation4], 1
    %1353 = vsyncpa %s1352, 1

</llo_original>
